<compile_context>
chip_gen: v5e
topology: v5e:2x2
jax: 0.10.0
libtpu: 0.0.40
codegen_flags: <defaults>
</compile_context>

<pallas_src>
import math

import jax
import jax.numpy as jnp
from jax.experimental import pallas as pl
from jax.experimental.pallas import tpu as pltpu

HEAD = 4        # MutiHeadMlp head count (hard-coded in MixerBlock)
EPS = 1e-6      # LayerNorm eps
_SQRT_2_OVER_PI = 0.7978845608028654


def _gelu(x):
    # tanh-approx GELU: the transcendental runs on the EUP (separate VLIW slot).
    return 0.5 * x * (1.0 + jnp.tanh(_SQRT_2_OVER_PI * (x + 0.044715 * x * x * x)))


def _layernorm(x, w, b):
    # Single-pass statistics: var = E[x^2] - E[x]^2 (one fewer full-tensor pass).
    mu = jnp.mean(x, axis=-1, keepdims=True)
    ms = jnp.mean(x * x, axis=-1, keepdims=True)
    var = ms - mu * mu
    return (x - mu) * jax.lax.rsqrt(var + EPS) * w + b


def mixer_block_kernel(x_ref,
                       ln1w_ref, ln1b_ref,
                       tfc1t_ref, tb1t_ref, tfc2t_ref, tb2t_ref,
                       ln2w_ref, ln2b_ref,
                       cfc1w_ref, cfc1b_ref, cfc2w_ref, cfc2b_ref,
                       o_ref, mix_ref):
    Bt, N, D = x_ref.shape
    Ch = D // HEAD

    x_all = x_ref[...]                                           # (Bt, N, D) f32
    xn = _layernorm(x_all, ln1w_ref[...], ln1b_ref[...])         # f32
    xn_bf = xn.astype(jnp.bfloat16)                              # matmul operand

    # ---- token mixing: per (batch, head) MXU dots with pre-transposed weights.
    #      Each head's (N, Ch) output + residual goes straight into the VMEM
    #      scratch column slice (no transposes, no concatenate).
    for b in range(Bt):                                          # static, Bt is small
        for h in range(HEAD):
            lo, hi = h * Ch, (h + 1) * Ch
            xh = xn_bf[b, :, lo:hi]                              # (N, Ch) bf16
            hh = jnp.dot(tfc1t_ref[h], xh,
                         preferred_element_type=jnp.float32)     # (Ht, Ch) f32
            hh = _gelu(hh + tb1t_ref[h])                         # bias (Ht, 1)
            yh = jnp.dot(tfc2t_ref[h], hh.astype(jnp.bfloat16),
                         preferred_element_type=jnp.float32)     # (N, Ch) f32
            mix_ref[b, :, lo:hi] = x_all[b, :, lo:hi] + yh + tb2t_ref[h]

    # ---- channel mixing: one tall (Bt*N, D) slab through the MLP ----
    x2 = mix_ref[...].reshape(Bt * N, D)                         # f32 residual stream
    xn2 = _layernorm(x2, ln2w_ref[...], ln2b_ref[...])
    h2 = jnp.dot(xn2.astype(jnp.bfloat16), cfc1w_ref[...],
                 preferred_element_type=jnp.float32) + cfc1b_ref[...]
    h2 = _gelu(h2)
    y2 = jnp.dot(h2.astype(jnp.bfloat16), cfc2w_ref[...],
                 preferred_element_type=jnp.float32) + cfc2b_ref[...]
    o_ref[...] = (x2 + y2).reshape(Bt, N, D)


def _pick_block_b(B, N, D, budget_bytes=8 << 20, max_bt=8):
    """Largest batch tile that keeps >=2 grid steps and fits a modest VMEM budget."""
    per_b = N * D * 4 * 2 * 2            # f32 in+out blocks, double-buffered
    cands = [bt for bt in range(1, min(B, max_bt) + 1)
             if B % bt == 0 and bt * per_b <= budget_bytes and B // bt >= 2]
    return max(cands) if cands else 1


def mixer_block(x, params, *, block_b=None):
    B, N, D = x.shape
    assert D % HEAD == 0, "dim must be divisible by 4 heads"
    Bt = block_b if block_b is not None else _pick_block_b(B, N, D)
    assert B % Bt == 0

    f32, bf16 = jnp.float32, jnp.bfloat16
    # Pre-transpose / pre-cast once on the host side so the kernel never transposes.
    weights = [
        params["ln1_w"].astype(f32), params["ln1_b"].astype(f32),
        jnp.swapaxes(params["tok_fc1"], 1, 2).astype(bf16),   # (H, Ht, N)
        jnp.swapaxes(params["tok_b1"], 1, 2).astype(f32),     # (H, Ht, 1)
        jnp.swapaxes(params["tok_fc2"], 1, 2).astype(bf16),   # (H, N, Ht)
        jnp.swapaxes(params["tok_b2"], 1, 2).astype(f32),     # (H, N, 1)
        params["ln2_w"].astype(f32), params["ln2_b"].astype(f32),
        params["ch_fc1_w"].astype(bf16), params["ch_fc1_b"].astype(f32),
        params["ch_fc2_w"].astype(bf16), params["ch_fc2_b"].astype(f32),
    ]

    def full_spec(a):
        nd = a.ndim
        return pl.BlockSpec(a.shape, lambda i, _nd=nd: (0,) * _nd)

    in_specs = ([pl.BlockSpec((Bt, N, D), lambda i: (i, 0, 0))]
                + [full_spec(w) for w in weights])
    out_spec = pl.BlockSpec((Bt, N, D), lambda i: (i, 0, 0))

    # Raise the scoped-VMEM limit only when the resident weights + double-buffered
    # blocks outgrow the conservative per-generation defaults (v5e 16 MiB, v7x 32 MiB).
    block_bytes = Bt * N * D * 4
    weight_bytes = sum(w.size * w.dtype.itemsize for w in weights)
    est = 2 * 2 * block_bytes + 2 * weight_bytes + block_bytes + (2 << 20)
    vmem_limit = int(min(est, 60 * 1024 * 1024)) if est > (16 << 20) else None

    return pl.pallas_call(
        mixer_block_kernel,
        out_shape=jax.ShapeDtypeStruct((B, N, D), jnp.float32),
        grid=(B // Bt,),
        in_specs=in_specs,
        out_specs=out_spec,
        scratch_shapes=[pltpu.VMEM((Bt, N, D), jnp.float32)],
        compiler_params=pltpu.CompilerParams(
            dimension_semantics=("parallel",),
            vmem_limit_bytes=vmem_limit,
        ),
    )(x.astype(jnp.float32), *weights)


def mixer_block_ref(x, params):
    """Pure-JAX f32 reference of the PyTorch MixerBlock forward (same GELU variant)."""
    B, N, D = x.shape
    Ch = D // HEAD
    xn = _layernorm(x, params["ln1_w"], params["ln1_b"])
    xt = jnp.swapaxes(xn, 1, 2).reshape(B, HEAD, Ch, N)
    h = _gelu(jnp.einsum("bhcn,hnt->bhct", xt, params["tok_fc1"]) + params["tok_b1"][None])
    y = jnp.einsum("bhct,htn->bhcn", h, params["tok_fc2"]) + params["tok_b2"][None]
    x = x + jnp.swapaxes(y.reshape(B, D, N), 1, 2)
    xn2 = _layernorm(x, params["ln2_w"], params["ln2_b"])
    h2 = _gelu(xn2 @ params["ch_fc1_w"] + params["ch_fc1_b"])
    return x + h2 @ params["ch_fc2_w"] + params["ch_fc2_b"]


def init_params(key, seq_len, dim, mlp_ratio=(0.5, 4.0)):
    """Deterministic synthetic parameters matching MixerBlock.__init__ shapes."""
    tokens_dim = int(mlp_ratio[0] * dim)       # hidden of token MLP (pre-head-split)
    channels_dim = int(mlp_ratio[1] * dim)     # hidden of channel MLP
    ht = tokens_dim // HEAD                    # per-head hidden (MutiHeadMlp)
    ks = jax.random.split(key, 6)

    def xavier(k, shape, fan_in, fan_out):
        a = math.sqrt(6.0 / (fan_in + fan_out))
        return jax.random.uniform(k, shape, jnp.float32, -a, a)

    def uniform(k, shape, fan_in):
        a = 1.0 / math.sqrt(fan_in)
        return jax.random.uniform(k, shape, jnp.float32, -a, a)

    return {
        # norm1 (LayerNorm(dim)): gamma=1, beta=0
        "ln1_w": jnp.ones((1, dim), jnp.float32),
        "ln1_b": jnp.zeros((1, dim), jnp.float32),
        # mlp_tokens = MutiHeadMlp(seq_len, tokens_dim, head=4)
        "tok_fc1": xavier(ks[0], (HEAD, seq_len, ht), seq_len * ht, HEAD * ht),
        "tok_b1": jnp.zeros((HEAD, 1, ht), jnp.float32),
        "tok_fc2": xavier(ks[1], (HEAD, ht, seq_len), ht * seq_len, HEAD * seq_len),
        "tok_b2": jnp.zeros((HEAD, 1, seq_len), jnp.float32),
        # norm2 (LayerNorm(dim))
        "ln2_w": jnp.ones((1, dim), jnp.float32),
        "ln2_b": jnp.zeros((1, dim), jnp.float32),
        # mlp_channels = Mlp(dim, channels_dim): weights stored as (in, out)
        "ch_fc1_w": uniform(ks[2], (dim, channels_dim), dim),
        "ch_fc1_b": uniform(ks[3], (1, channels_dim), dim),
        "ch_fc2_w": uniform(ks[4], (channels_dim, dim), channels_dim),
        "ch_fc2_b": uniform(ks[5], (1, dim), channels_dim),
    }


if __name__ == "__main__":
    B, N, D = 4, 8, 32   # batch=4, seq_len=8, dim=32 (dim divisible by 4 heads)
    key = jax.random.PRNGKey(0)
    kx, kp = jax.random.split(key)
    x = jax.random.normal(kx, (B, N, D), jnp.float32)
    params = init_params(kp, N, D)

    out = jax.block_until_ready(mixer_block(x, params))
    assert out.shape == (B, N, D) and out.dtype == jnp.float32

    # Sanity check against a pure-JAX f32 reference (loose tolerance: the kernel
    # uses bf16 matmul operands with f32 accumulation).
    ref = mixer_block_ref(x, params)
    err = float(jnp.max(jnp.abs(out - ref)))
    assert err < 5e-2, f"mismatch vs reference: max abs err = {err}"
    print("KERNEL_OK")
</pallas_src>

<mosaic_0001>
module attributes {stable_mosaic.version = 11 : i64} {
  func.func @mixer_block_kernel(%arg0: i32, %arg1: memref<2x8x32xf32, #tpu.memory_space<vmem>>, %arg2: memref<1x32xf32, #tpu.memory_space<vmem>>, %arg3: memref<1x32xf32, #tpu.memory_space<vmem>>, %arg4: memref<4x4x8xbf16, #tpu.memory_space<vmem>>, %arg5: memref<4x4x1xf32, #tpu.memory_space<vmem>>, %arg6: memref<4x8x4xbf16, #tpu.memory_space<vmem>>, %arg7: memref<4x8x1xf32, #tpu.memory_space<vmem>>, %arg8: memref<1x32xf32, #tpu.memory_space<vmem>>, %arg9: memref<1x32xf32, #tpu.memory_space<vmem>>, %arg10: memref<32x128xbf16, #tpu.memory_space<vmem>>, %arg11: memref<1x128xf32, #tpu.memory_space<vmem>>, %arg12: memref<128x32xbf16, #tpu.memory_space<vmem>>, %arg13: memref<1x32xf32, #tpu.memory_space<vmem>>, %arg14: memref<2x8x32xf32, #tpu.memory_space<vmem>>, %arg15: memref<2x8x32xf32, #tpu.memory_space<vmem>>) attributes {dimension_semantics = [#tpu.dimension_semantics<parallel>], iteration_bounds = array<i64: 2>, scalar_prefetch = 0 : i64, scratch_operands = 1 : i64, tpu.core_type = #tpu.core_type<tc>, window_params = [{transform_indices = @transform_0, window_bounds = array<i64: 2, 8, 32>}, {pipeline_mode = #tpu.pipeline_mode<synchronous>, transform_indices = @transform_1, window_bounds = array<i64: 1, 32>}, {pipeline_mode = #tpu.pipeline_mode<synchronous>, transform_indices = @transform_2, window_bounds = array<i64: 1, 32>}, {pipeline_mode = #tpu.pipeline_mode<synchronous>, transform_indices = @transform_3, window_bounds = array<i64: 4, 4, 8>}, {pipeline_mode = #tpu.pipeline_mode<synchronous>, transform_indices = @transform_4, window_bounds = array<i64: 4, 4, 1>}, {pipeline_mode = #tpu.pipeline_mode<synchronous>, transform_indices = @transform_5, window_bounds = array<i64: 4, 8, 4>}, {pipeline_mode = #tpu.pipeline_mode<synchronous>, transform_indices = @transform_6, window_bounds = array<i64: 4, 8, 1>}, {pipeline_mode = #tpu.pipeline_mode<synchronous>, transform_indices = @transform_7, window_bounds = array<i64: 1, 32>}, {pipeline_mode = #tpu.pipeline_mode<synchronous>, transform_indices = @transform_8, window_bounds = array<i64: 1, 32>}, {pipeline_mode = #tpu.pipeline_mode<synchronous>, transform_indices = @transform_9, window_bounds = array<i64: 32, 128>}, {pipeline_mode = #tpu.pipeline_mode<synchronous>, transform_indices = @transform_10, window_bounds = array<i64: 1, 128>}, {pipeline_mode = #tpu.pipeline_mode<synchronous>, transform_indices = @transform_11, window_bounds = array<i64: 128, 32>}, {pipeline_mode = #tpu.pipeline_mode<synchronous>, transform_indices = @transform_12, window_bounds = array<i64: 1, 32>}, {transform_indices = @transform_13, window_bounds = array<i64: 2, 8, 32>}]} {
    %c0 = arith.constant 0 : index
    %c0_0 = arith.constant 0 : index
    %c0_1 = arith.constant 0 : index
    %0 = vector.load %arg1[%c0, %c0_0, %c0_1] : memref<2x8x32xf32, #tpu.memory_space<vmem>>, vector<2x8x32xf32>
    %c0_2 = arith.constant 0 : index
    %c0_3 = arith.constant 0 : index
    %1 = vector.load %arg2[%c0_2, %c0_3] : memref<1x32xf32, #tpu.memory_space<vmem>>, vector<1x32xf32>
    %c0_4 = arith.constant 0 : index
    %c0_5 = arith.constant 0 : index
    %2 = vector.load %arg3[%c0_4, %c0_5] : memref<1x32xf32, #tpu.memory_space<vmem>>, vector<1x32xf32>
    %cst = arith.constant dense<0.000000e+00> : vector<2x8xf32>
    %3 = vector.multi_reduction <add>, %0, %cst [2] : vector<2x8x32xf32> to vector<2x8xf32>
    %4 = vector.shape_cast %3 : vector<2x8xf32> to vector<2x8x1xf32>
    %cst_6 = arith.constant 3.200000e+01 : f32
    %5 = vector.broadcast %cst_6 : f32 to vector<2x8x1xf32>
    %6 = arith.divf %4, %5 : vector<2x8x1xf32>
    %7 = arith.mulf %0, %0 : vector<2x8x32xf32>
    %cst_7 = arith.constant dense<0.000000e+00> : vector<2x8xf32>
    %8 = vector.multi_reduction <add>, %7, %cst_7 [2] : vector<2x8x32xf32> to vector<2x8xf32>
    %9 = vector.shape_cast %8 : vector<2x8xf32> to vector<2x8x1xf32>
    %cst_8 = arith.constant 3.200000e+01 : f32
    %10 = vector.broadcast %cst_8 : f32 to vector<2x8x1xf32>
    %11 = arith.divf %9, %10 : vector<2x8x1xf32>
    %12 = arith.mulf %6, %6 : vector<2x8x1xf32>
    %13 = arith.subf %11, %12 : vector<2x8x1xf32>
    %14 = vector.broadcast %6 : vector<2x8x1xf32> to vector<2x8x32xf32>
    %15 = arith.subf %0, %14 : vector<2x8x32xf32>
    %cst_9 = arith.constant 9.99999997E-7 : f32
    %16 = vector.broadcast %cst_9 : f32 to vector<2x8x1xf32>
    %17 = arith.addf %13, %16 : vector<2x8x1xf32>
    %18 = math.rsqrt %17 : vector<2x8x1xf32>
    %19 = vector.broadcast %18 : vector<2x8x1xf32> to vector<2x8x32xf32>
    %20 = arith.mulf %15, %19 : vector<2x8x32xf32>
    %21 = vector.shape_cast %1 : vector<1x32xf32> to vector<1x1x32xf32>
    %22 = vector.broadcast %21 : vector<1x1x32xf32> to vector<2x8x32xf32>
    %23 = arith.mulf %20, %22 : vector<2x8x32xf32>
    %24 = vector.shape_cast %2 : vector<1x32xf32> to vector<1x1x32xf32>
    %25 = vector.broadcast %24 : vector<1x1x32xf32> to vector<2x8x32xf32>
    %26 = arith.addf %23, %25 : vector<2x8x32xf32>
    %27 = arith.truncf %26 : vector<2x8x32xf32> to vector<2x8x32xbf16>
    %28 = vector.extract_strided_slice %27 {offsets = [0, 0, 0], sizes = [1, 8, 8], strides = [1, 1, 1]} : vector<2x8x32xbf16> to vector<1x8x8xbf16>
    %29 = vector.shape_cast %28 : vector<1x8x8xbf16> to vector<8x8xbf16>
    %c0_10 = arith.constant 0 : index
    %c0_11 = arith.constant 0 : index
    %c0_12 = arith.constant 0 : index
    %30 = vector.load %arg4[%c0_10, %c0_11, %c0_12] : memref<4x4x8xbf16, #tpu.memory_space<vmem>>, vector<1x4x8xbf16>
    %31 = vector.shape_cast %30 : vector<1x4x8xbf16> to vector<4x8xbf16>
    %cst_13 = arith.constant dense<0.000000e+00> : vector<4x8xf32>
    %32 = tpu.matmul %31, %29, %cst_13 {dimension_numbers = #tpu.dot_dimension_numbers<[1], [0], [0], [1], [0, 0, 1, 1], [], []>} : vector<4x8xbf16>, vector<8x8xbf16>, vector<4x8xf32> -> vector<4x8xf32>
    %c0_14 = arith.constant 0 : index
    %c0_15 = arith.constant 0 : index
    %c0_16 = arith.constant 0 : index
    %33 = vector.load %arg5[%c0_14, %c0_15, %c0_16] : memref<4x4x1xf32, #tpu.memory_space<vmem>>, vector<1x4x1xf32>
    %34 = vector.shape_cast %33 : vector<1x4x1xf32> to vector<4x1xf32>
    %35 = vector.broadcast %34 : vector<4x1xf32> to vector<4x8xf32>
    %36 = arith.addf %32, %35 : vector<4x8xf32>
    %cst_17 = arith.constant 5.000000e-01 : f32
    %37 = vector.broadcast %cst_17 : f32 to vector<4x8xf32>
    %38 = arith.mulf %37, %36 : vector<4x8xf32>
    %cst_18 = arith.constant 4.471500e-02 : f32
    %39 = vector.broadcast %cst_18 : f32 to vector<4x8xf32>
    %40 = arith.mulf %39, %36 : vector<4x8xf32>
    %41 = arith.mulf %40, %36 : vector<4x8xf32>
    %42 = arith.mulf %41, %36 : vector<4x8xf32>
    %43 = arith.addf %36, %42 : vector<4x8xf32>
    %cst_19 = arith.constant 0.797884583 : f32
    %44 = vector.broadcast %cst_19 : f32 to vector<4x8xf32>
    %45 = arith.mulf %44, %43 : vector<4x8xf32>
    %46 = math.tanh %45 : vector<4x8xf32>
    %cst_20 = arith.constant 1.000000e+00 : f32
    %47 = vector.broadcast %cst_20 : f32 to vector<4x8xf32>
    %48 = arith.addf %47, %46 : vector<4x8xf32>
    %49 = arith.mulf %38, %48 : vector<4x8xf32>
    %c0_21 = arith.constant 0 : index
    %c0_22 = arith.constant 0 : index
    %c0_23 = arith.constant 0 : index
    %50 = vector.load %arg6[%c0_21, %c0_22, %c0_23] : memref<4x8x4xbf16, #tpu.memory_space<vmem>>, vector<1x8x4xbf16>
    %51 = vector.shape_cast %50 : vector<1x8x4xbf16> to vector<8x4xbf16>
    %52 = arith.truncf %49 : vector<4x8xf32> to vector<4x8xbf16>
    %cst_24 = arith.constant dense<0.000000e+00> : vector<8x8xf32>
    %53 = tpu.matmul %51, %52, %cst_24 {dimension_numbers = #tpu.dot_dimension_numbers<[1], [0], [0], [1], [0, 0, 1, 1], [], []>} : vector<8x4xbf16>, vector<4x8xbf16>, vector<8x8xf32> -> vector<8x8xf32>
    %54 = vector.extract_strided_slice %0 {offsets = [0, 0, 0], sizes = [1, 8, 8], strides = [1, 1, 1]} : vector<2x8x32xf32> to vector<1x8x8xf32>
    %55 = vector.shape_cast %54 : vector<1x8x8xf32> to vector<8x8xf32>
    %56 = arith.addf %55, %53 : vector<8x8xf32>
    %c0_25 = arith.constant 0 : index
    %c0_26 = arith.constant 0 : index
    %c0_27 = arith.constant 0 : index
    %57 = vector.load %arg7[%c0_25, %c0_26, %c0_27] : memref<4x8x1xf32, #tpu.memory_space<vmem>>, vector<1x8x1xf32>
    %58 = vector.shape_cast %57 : vector<1x8x1xf32> to vector<8x1xf32>
    %59 = vector.broadcast %58 : vector<8x1xf32> to vector<8x8xf32>
    %60 = arith.addf %56, %59 : vector<8x8xf32>
    %c0_28 = arith.constant 0 : index
    %c0_29 = arith.constant 0 : index
    %c0_30 = arith.constant 0 : index
    %61 = vector.load %arg15[%c0_28, %c0_29, %c0_30] : memref<2x8x32xf32, #tpu.memory_space<vmem>>, vector<1x8x8xf32>
    %62 = vector.shape_cast %61 : vector<1x8x8xf32> to vector<8x8xf32>
    %63 = vector.shape_cast %60 : vector<8x8xf32> to vector<1x8x8xf32>
    tpu.vector_store %arg15[%c0_28, %c0_29, %c0_30], %63 {strides = array<i32>} : memref<2x8x32xf32, #tpu.memory_space<vmem>>, vector<1x8x8xf32>,
    %64 = vector.extract_strided_slice %27 {offsets = [0, 0, 8], sizes = [1, 8, 8], strides = [1, 1, 1]} : vector<2x8x32xbf16> to vector<1x8x8xbf16>
    %65 = vector.shape_cast %64 : vector<1x8x8xbf16> to vector<8x8xbf16>
    %c1 = arith.constant 1 : index
    %c0_31 = arith.constant 0 : index
    %c0_32 = arith.constant 0 : index
    %66 = vector.load %arg4[%c1, %c0_31, %c0_32] : memref<4x4x8xbf16, #tpu.memory_space<vmem>>, vector<1x4x8xbf16>
    %67 = vector.shape_cast %66 : vector<1x4x8xbf16> to vector<4x8xbf16>
    %cst_33 = arith.constant dense<0.000000e+00> : vector<4x8xf32>
    %68 = tpu.matmul %67, %65, %cst_33 {dimension_numbers = #tpu.dot_dimension_numbers<[1], [0], [0], [1], [0, 0, 1, 1], [], []>} : vector<4x8xbf16>, vector<8x8xbf16>, vector<4x8xf32> -> vector<4x8xf32>
    %c1_34 = arith.constant 1 : index
    %c0_35 = arith.constant 0 : index
    %c0_36 = arith.constant 0 : index
    %69 = vector.load %arg5[%c1_34, %c0_35, %c0_36] : memref<4x4x1xf32, #tpu.memory_space<vmem>>, vector<1x4x1xf32>
    %70 = vector.shape_cast %69 : vector<1x4x1xf32> to vector<4x1xf32>
    %71 = vector.broadcast %70 : vector<4x1xf32> to vector<4x8xf32>
    %72 = arith.addf %68, %71 : vector<4x8xf32>
    %cst_37 = arith.constant 5.000000e-01 : f32
    %73 = vector.broadcast %cst_37 : f32 to vector<4x8xf32>
    %74 = arith.mulf %73, %72 : vector<4x8xf32>
    %cst_38 = arith.constant 4.471500e-02 : f32
    %75 = vector.broadcast %cst_38 : f32 to vector<4x8xf32>
    %76 = arith.mulf %75, %72 : vector<4x8xf32>
    %77 = arith.mulf %76, %72 : vector<4x8xf32>
    %78 = arith.mulf %77, %72 : vector<4x8xf32>
    %79 = arith.addf %72, %78 : vector<4x8xf32>
    %cst_39 = arith.constant 0.797884583 : f32
    %80 = vector.broadcast %cst_39 : f32 to vector<4x8xf32>
    %81 = arith.mulf %80, %79 : vector<4x8xf32>
    %82 = math.tanh %81 : vector<4x8xf32>
    %cst_40 = arith.constant 1.000000e+00 : f32
    %83 = vector.broadcast %cst_40 : f32 to vector<4x8xf32>
    %84 = arith.addf %83, %82 : vector<4x8xf32>
    %85 = arith.mulf %74, %84 : vector<4x8xf32>
    %c1_41 = arith.constant 1 : index
    %c0_42 = arith.constant 0 : index
    %c0_43 = arith.constant 0 : index
    %86 = vector.load %arg6[%c1_41, %c0_42, %c0_43] : memref<4x8x4xbf16, #tpu.memory_space<vmem>>, vector<1x8x4xbf16>
    %87 = vector.shape_cast %86 : vector<1x8x4xbf16> to vector<8x4xbf16>
    %88 = arith.truncf %85 : vector<4x8xf32> to vector<4x8xbf16>
    %cst_44 = arith.constant dense<0.000000e+00> : vector<8x8xf32>
    %89 = tpu.matmul %87, %88, %cst_44 {dimension_numbers = #tpu.dot_dimension_numbers<[1], [0], [0], [1], [0, 0, 1, 1], [], []>} : vector<8x4xbf16>, vector<4x8xbf16>, vector<8x8xf32> -> vector<8x8xf32>
    %90 = vector.extract_strided_slice %0 {offsets = [0, 0, 8], sizes = [1, 8, 8], strides = [1, 1, 1]} : vector<2x8x32xf32> to vector<1x8x8xf32>
    %91 = vector.shape_cast %90 : vector<1x8x8xf32> to vector<8x8xf32>
    %92 = arith.addf %91, %89 : vector<8x8xf32>
    %c1_45 = arith.constant 1 : index
    %c0_46 = arith.constant 0 : index
    %c0_47 = arith.constant 0 : index
    %93 = vector.load %arg7[%c1_45, %c0_46, %c0_47] : memref<4x8x1xf32, #tpu.memory_space<vmem>>, vector<1x8x1xf32>
    %94 = vector.shape_cast %93 : vector<1x8x1xf32> to vector<8x1xf32>
    %95 = vector.broadcast %94 : vector<8x1xf32> to vector<8x8xf32>
    %96 = arith.addf %92, %95 : vector<8x8xf32>
    %c0_48 = arith.constant 0 : index
    %c0_49 = arith.constant 0 : index
    %c8 = arith.constant 8 : index
    %97 = vector.load %arg15[%c0_48, %c0_49, %c8] : memref<2x8x32xf32, #tpu.memory_space<vmem>>, vector<1x8x8xf32>
    %98 = vector.shape_cast %97 : vector<1x8x8xf32> to vector<8x8xf32>
    %99 = vector.shape_cast %96 : vector<8x8xf32> to vector<1x8x8xf32>
    tpu.vector_store %arg15[%c0_48, %c0_49, %c8], %99 {strides = array<i32>} : memref<2x8x32xf32, #tpu.memory_space<vmem>>, vector<1x8x8xf32>,
    %100 = vector.extract_strided_slice %27 {offsets = [0, 0, 16], sizes = [1, 8, 8], strides = [1, 1, 1]} : vector<2x8x32xbf16> to vector<1x8x8xbf16>
    %101 = vector.shape_cast %100 : vector<1x8x8xbf16> to vector<8x8xbf16>
    %c2 = arith.constant 2 : index
    %c0_50 = arith.constant 0 : index
    %c0_51 = arith.constant 0 : index
    %102 = vector.load %arg4[%c2, %c0_50, %c0_51] : memref<4x4x8xbf16, #tpu.memory_space<vmem>>, vector<1x4x8xbf16>
    %103 = vector.shape_cast %102 : vector<1x4x8xbf16> to vector<4x8xbf16>
    %cst_52 = arith.constant dense<0.000000e+00> : vector<4x8xf32>
    %104 = tpu.matmul %103, %101, %cst_52 {dimension_numbers = #tpu.dot_dimension_numbers<[1], [0], [0], [1], [0, 0, 1, 1], [], []>} : vector<4x8xbf16>, vector<8x8xbf16>, vector<4x8xf32> -> vector<4x8xf32>
    %c2_53 = arith.constant 2 : index
    %c0_54 = arith.constant 0 : index
    %c0_55 = arith.constant 0 : index
    %105 = vector.load %arg5[%c2_53, %c0_54, %c0_55] : memref<4x4x1xf32, #tpu.memory_space<vmem>>, vector<1x4x1xf32>
    %106 = vector.shape_cast %105 : vector<1x4x1xf32> to vector<4x1xf32>
    %107 = vector.broadcast %106 : vector<4x1xf32> to vector<4x8xf32>
    %108 = arith.addf %104, %107 : vector<4x8xf32>
    %cst_56 = arith.constant 5.000000e-01 : f32
    %109 = vector.broadcast %cst_56 : f32 to vector<4x8xf32>
    %110 = arith.mulf %109, %108 : vector<4x8xf32>
    %cst_57 = arith.constant 4.471500e-02 : f32
    %111 = vector.broadcast %cst_57 : f32 to vector<4x8xf32>
    %112 = arith.mulf %111, %108 : vector<4x8xf32>
    %113 = arith.mulf %112, %108 : vector<4x8xf32>
    %114 = arith.mulf %113, %108 : vector<4x8xf32>
    %115 = arith.addf %108, %114 : vector<4x8xf32>
    %cst_58 = arith.constant 0.797884583 : f32
    %116 = vector.broadcast %cst_58 : f32 to vector<4x8xf32>
    %117 = arith.mulf %116, %115 : vector<4x8xf32>
    %118 = math.tanh %117 : vector<4x8xf32>
    %cst_59 = arith.constant 1.000000e+00 : f32
    %119 = vector.broadcast %cst_59 : f32 to vector<4x8xf32>
    %120 = arith.addf %119, %118 : vector<4x8xf32>
    %121 = arith.mulf %110, %120 : vector<4x8xf32>
    %c2_60 = arith.constant 2 : index
    %c0_61 = arith.constant 0 : index
    %c0_62 = arith.constant 0 : index
    %122 = vector.load %arg6[%c2_60, %c0_61, %c0_62] : memref<4x8x4xbf16, #tpu.memory_space<vmem>>, vector<1x8x4xbf16>
    %123 = vector.shape_cast %122 : vector<1x8x4xbf16> to vector<8x4xbf16>
    %124 = arith.truncf %121 : vector<4x8xf32> to vector<4x8xbf16>
    %cst_63 = arith.constant dense<0.000000e+00> : vector<8x8xf32>
    %125 = tpu.matmul %123, %124, %cst_63 {dimension_numbers = #tpu.dot_dimension_numbers<[1], [0], [0], [1], [0, 0, 1, 1], [], []>} : vector<8x4xbf16>, vector<4x8xbf16>, vector<8x8xf32> -> vector<8x8xf32>
    %126 = vector.extract_strided_slice %0 {offsets = [0, 0, 16], sizes = [1, 8, 8], strides = [1, 1, 1]} : vector<2x8x32xf32> to vector<1x8x8xf32>
    %127 = vector.shape_cast %126 : vector<1x8x8xf32> to vector<8x8xf32>
    %128 = arith.addf %127, %125 : vector<8x8xf32>
    %c2_64 = arith.constant 2 : index
    %c0_65 = arith.constant 0 : index
    %c0_66 = arith.constant 0 : index
    %129 = vector.load %arg7[%c2_64, %c0_65, %c0_66] : memref<4x8x1xf32, #tpu.memory_space<vmem>>, vector<1x8x1xf32>
    %130 = vector.shape_cast %129 : vector<1x8x1xf32> to vector<8x1xf32>
    %131 = vector.broadcast %130 : vector<8x1xf32> to vector<8x8xf32>
    %132 = arith.addf %128, %131 : vector<8x8xf32>
    %c0_67 = arith.constant 0 : index
    %c0_68 = arith.constant 0 : index
    %c16 = arith.constant 16 : index
    %133 = vector.load %arg15[%c0_67, %c0_68, %c16] : memref<2x8x32xf32, #tpu.memory_space<vmem>>, vector<1x8x8xf32>
    %134 = vector.shape_cast %133 : vector<1x8x8xf32> to vector<8x8xf32>
    %135 = vector.shape_cast %132 : vector<8x8xf32> to vector<1x8x8xf32>
    tpu.vector_store %arg15[%c0_67, %c0_68, %c16], %135 {strides = array<i32>} : memref<2x8x32xf32, #tpu.memory_space<vmem>>, vector<1x8x8xf32>,
    %136 = vector.extract_strided_slice %27 {offsets = [0, 0, 24], sizes = [1, 8, 8], strides = [1, 1, 1]} : vector<2x8x32xbf16> to vector<1x8x8xbf16>
    %137 = vector.shape_cast %136 : vector<1x8x8xbf16> to vector<8x8xbf16>
    %c3 = arith.constant 3 : index
    %c0_69 = arith.constant 0 : index
    %c0_70 = arith.constant 0 : index
    %138 = vector.load %arg4[%c3, %c0_69, %c0_70] : memref<4x4x8xbf16, #tpu.memory_space<vmem>>, vector<1x4x8xbf16>
    %139 = vector.shape_cast %138 : vector<1x4x8xbf16> to vector<4x8xbf16>
    %cst_71 = arith.constant dense<0.000000e+00> : vector<4x8xf32>
    %140 = tpu.matmul %139, %137, %cst_71 {dimension_numbers = #tpu.dot_dimension_numbers<[1], [0], [0], [1], [0, 0, 1, 1], [], []>} : vector<4x8xbf16>, vector<8x8xbf16>, vector<4x8xf32> -> vector<4x8xf32>
    %c3_72 = arith.constant 3 : index
    %c0_73 = arith.constant 0 : index
    %c0_74 = arith.constant 0 : index
    %141 = vector.load %arg5[%c3_72, %c0_73, %c0_74] : memref<4x4x1xf32, #tpu.memory_space<vmem>>, vector<1x4x1xf32>
    %142 = vector.shape_cast %141 : vector<1x4x1xf32> to vector<4x1xf32>
    %143 = vector.broadcast %142 : vector<4x1xf32> to vector<4x8xf32>
    %144 = arith.addf %140, %143 : vector<4x8xf32>
    %cst_75 = arith.constant 5.000000e-01 : f32
    %145 = vector.broadcast %cst_75 : f32 to vector<4x8xf32>
    %146 = arith.mulf %145, %144 : vector<4x8xf32>
    %cst_76 = arith.constant 4.471500e-02 : f32
    %147 = vector.broadcast %cst_76 : f32 to vector<4x8xf32>
    %148 = arith.mulf %147, %144 : vector<4x8xf32>
    %149 = arith.mulf %148, %144 : vector<4x8xf32>
    %150 = arith.mulf %149, %144 : vector<4x8xf32>
    %151 = arith.addf %144, %150 : vector<4x8xf32>
    %cst_77 = arith.constant 0.797884583 : f32
    %152 = vector.broadcast %cst_77 : f32 to vector<4x8xf32>
    %153 = arith.mulf %152, %151 : vector<4x8xf32>
    %154 = math.tanh %153 : vector<4x8xf32>
    %cst_78 = arith.constant 1.000000e+00 : f32
    %155 = vector.broadcast %cst_78 : f32 to vector<4x8xf32>
    %156 = arith.addf %155, %154 : vector<4x8xf32>
    %157 = arith.mulf %146, %156 : vector<4x8xf32>
    %c3_79 = arith.constant 3 : index
    %c0_80 = arith.constant 0 : index
    %c0_81 = arith.constant 0 : index
    %158 = vector.load %arg6[%c3_79, %c0_80, %c0_81] : memref<4x8x4xbf16, #tpu.memory_space<vmem>>, vector<1x8x4xbf16>
    %159 = vector.shape_cast %158 : vector<1x8x4xbf16> to vector<8x4xbf16>
    %160 = arith.truncf %157 : vector<4x8xf32> to vector<4x8xbf16>
    %cst_82 = arith.constant dense<0.000000e+00> : vector<8x8xf32>
    %161 = tpu.matmul %159, %160, %cst_82 {dimension_numbers = #tpu.dot_dimension_numbers<[1], [0], [0], [1], [0, 0, 1, 1], [], []>} : vector<8x4xbf16>, vector<4x8xbf16>, vector<8x8xf32> -> vector<8x8xf32>
    %162 = vector.extract_strided_slice %0 {offsets = [0, 0, 24], sizes = [1, 8, 8], strides = [1, 1, 1]} : vector<2x8x32xf32> to vector<1x8x8xf32>
    %163 = vector.shape_cast %162 : vector<1x8x8xf32> to vector<8x8xf32>
    %164 = arith.addf %163, %161 : vector<8x8xf32>
    %c3_83 = arith.constant 3 : index
    %c0_84 = arith.constant 0 : index
    %c0_85 = arith.constant 0 : index
    %165 = vector.load %arg7[%c3_83, %c0_84, %c0_85] : memref<4x8x1xf32, #tpu.memory_space<vmem>>, vector<1x8x1xf32>
    %166 = vector.shape_cast %165 : vector<1x8x1xf32> to vector<8x1xf32>
    %167 = vector.broadcast %166 : vector<8x1xf32> to vector<8x8xf32>
    %168 = arith.addf %164, %167 : vector<8x8xf32>
    %c0_86 = arith.constant 0 : index
    %c0_87 = arith.constant 0 : index
    %c24 = arith.constant 24 : index
    %169 = vector.load %arg15[%c0_86, %c0_87, %c24] : memref<2x8x32xf32, #tpu.memory_space<vmem>>, vector<1x8x8xf32>
    %170 = vector.shape_cast %169 : vector<1x8x8xf32> to vector<8x8xf32>
    %171 = vector.shape_cast %168 : vector<8x8xf32> to vector<1x8x8xf32>
    tpu.vector_store %arg15[%c0_86, %c0_87, %c24], %171 {strides = array<i32>} : memref<2x8x32xf32, #tpu.memory_space<vmem>>, vector<1x8x8xf32>,
    %172 = vector.extract_strided_slice %27 {offsets = [1, 0, 0], sizes = [1, 8, 8], strides = [1, 1, 1]} : vector<2x8x32xbf16> to vector<1x8x8xbf16>
    %173 = vector.shape_cast %172 : vector<1x8x8xbf16> to vector<8x8xbf16>
    %c0_88 = arith.constant 0 : index
    %c0_89 = arith.constant 0 : index
    %c0_90 = arith.constant 0 : index
    %174 = vector.load %arg4[%c0_88, %c0_89, %c0_90] : memref<4x4x8xbf16, #tpu.memory_space<vmem>>, vector<1x4x8xbf16>
    %175 = vector.shape_cast %174 : vector<1x4x8xbf16> to vector<4x8xbf16>
    %cst_91 = arith.constant dense<0.000000e+00> : vector<4x8xf32>
    %176 = tpu.matmul %175, %173, %cst_91 {dimension_numbers = #tpu.dot_dimension_numbers<[1], [0], [0], [1], [0, 0, 1, 1], [], []>} : vector<4x8xbf16>, vector<8x8xbf16>, vector<4x8xf32> -> vector<4x8xf32>
    %c0_92 = arith.constant 0 : index
    %c0_93 = arith.constant 0 : index
    %c0_94 = arith.constant 0 : index
    %177 = vector.load %arg5[%c0_92, %c0_93, %c0_94] : memref<4x4x1xf32, #tpu.memory_space<vmem>>, vector<1x4x1xf32>
    %178 = vector.shape_cast %177 : vector<1x4x1xf32> to vector<4x1xf32>
    %179 = vector.broadcast %178 : vector<4x1xf32> to vector<4x8xf32>
    %180 = arith.addf %176, %179 : vector<4x8xf32>
    %cst_95 = arith.constant 5.000000e-01 : f32
    %181 = vector.broadcast %cst_95 : f32 to vector<4x8xf32>
    %182 = arith.mulf %181, %180 : vector<4x8xf32>
    %cst_96 = arith.constant 4.471500e-02 : f32
    %183 = vector.broadcast %cst_96 : f32 to vector<4x8xf32>
    %184 = arith.mulf %183, %180 : vector<4x8xf32>
    %185 = arith.mulf %184, %180 : vector<4x8xf32>
    %186 = arith.mulf %185, %180 : vector<4x8xf32>
    %187 = arith.addf %180, %186 : vector<4x8xf32>
    %cst_97 = arith.constant 0.797884583 : f32
    %188 = vector.broadcast %cst_97 : f32 to vector<4x8xf32>
    %189 = arith.mulf %188, %187 : vector<4x8xf32>
    %190 = math.tanh %189 : vector<4x8xf32>
    %cst_98 = arith.constant 1.000000e+00 : f32
    %191 = vector.broadcast %cst_98 : f32 to vector<4x8xf32>
    %192 = arith.addf %191, %190 : vector<4x8xf32>
    %193 = arith.mulf %182, %192 : vector<4x8xf32>
    %c0_99 = arith.constant 0 : index
    %c0_100 = arith.constant 0 : index
    %c0_101 = arith.constant 0 : index
    %194 = vector.load %arg6[%c0_99, %c0_100, %c0_101] : memref<4x8x4xbf16, #tpu.memory_space<vmem>>, vector<1x8x4xbf16>
    %195 = vector.shape_cast %194 : vector<1x8x4xbf16> to vector<8x4xbf16>
    %196 = arith.truncf %193 : vector<4x8xf32> to vector<4x8xbf16>
    %cst_102 = arith.constant dense<0.000000e+00> : vector<8x8xf32>
    %197 = tpu.matmul %195, %196, %cst_102 {dimension_numbers = #tpu.dot_dimension_numbers<[1], [0], [0], [1], [0, 0, 1, 1], [], []>} : vector<8x4xbf16>, vector<4x8xbf16>, vector<8x8xf32> -> vector<8x8xf32>
    %198 = vector.extract_strided_slice %0 {offsets = [1, 0, 0], sizes = [1, 8, 8], strides = [1, 1, 1]} : vector<2x8x32xf32> to vector<1x8x8xf32>
    %199 = vector.shape_cast %198 : vector<1x8x8xf32> to vector<8x8xf32>
    %200 = arith.addf %199, %197 : vector<8x8xf32>
    %c0_103 = arith.constant 0 : index
    %c0_104 = arith.constant 0 : index
    %c0_105 = arith.constant 0 : index
    %201 = vector.load %arg7[%c0_103, %c0_104, %c0_105] : memref<4x8x1xf32, #tpu.memory_space<vmem>>, vector<1x8x1xf32>
    %202 = vector.shape_cast %201 : vector<1x8x1xf32> to vector<8x1xf32>
    %203 = vector.broadcast %202 : vector<8x1xf32> to vector<8x8xf32>
    %204 = arith.addf %200, %203 : vector<8x8xf32>
    %c1_106 = arith.constant 1 : index
    %c0_107 = arith.constant 0 : index
    %c0_108 = arith.constant 0 : index
    %205 = vector.load %arg15[%c1_106, %c0_107, %c0_108] : memref<2x8x32xf32, #tpu.memory_space<vmem>>, vector<1x8x8xf32>
    %206 = vector.shape_cast %205 : vector<1x8x8xf32> to vector<8x8xf32>
    %207 = vector.shape_cast %204 : vector<8x8xf32> to vector<1x8x8xf32>
    tpu.vector_store %arg15[%c1_106, %c0_107, %c0_108], %207 {strides = array<i32>} : memref<2x8x32xf32, #tpu.memory_space<vmem>>, vector<1x8x8xf32>,
    %208 = vector.extract_strided_slice %27 {offsets = [1, 0, 8], sizes = [1, 8, 8], strides = [1, 1, 1]} : vector<2x8x32xbf16> to vector<1x8x8xbf16>
    %209 = vector.shape_cast %208 : vector<1x8x8xbf16> to vector<8x8xbf16>
    %c1_109 = arith.constant 1 : index
    %c0_110 = arith.constant 0 : index
    %c0_111 = arith.constant 0 : index
    %210 = vector.load %arg4[%c1_109, %c0_110, %c0_111] : memref<4x4x8xbf16, #tpu.memory_space<vmem>>, vector<1x4x8xbf16>
    %211 = vector.shape_cast %210 : vector<1x4x8xbf16> to vector<4x8xbf16>
    %cst_112 = arith.constant dense<0.000000e+00> : vector<4x8xf32>
    %212 = tpu.matmul %211, %209, %cst_112 {dimension_numbers = #tpu.dot_dimension_numbers<[1], [0], [0], [1], [0, 0, 1, 1], [], []>} : vector<4x8xbf16>, vector<8x8xbf16>, vector<4x8xf32> -> vector<4x8xf32>
    %c1_113 = arith.constant 1 : index
    %c0_114 = arith.constant 0 : index
    %c0_115 = arith.constant 0 : index
    %213 = vector.load %arg5[%c1_113, %c0_114, %c0_115] : memref<4x4x1xf32, #tpu.memory_space<vmem>>, vector<1x4x1xf32>
    %214 = vector.shape_cast %213 : vector<1x4x1xf32> to vector<4x1xf32>
    %215 = vector.broadcast %214 : vector<4x1xf32> to vector<4x8xf32>
    %216 = arith.addf %212, %215 : vector<4x8xf32>
    %cst_116 = arith.constant 5.000000e-01 : f32
    %217 = vector.broadcast %cst_116 : f32 to vector<4x8xf32>
    %218 = arith.mulf %217, %216 : vector<4x8xf32>
    %cst_117 = arith.constant 4.471500e-02 : f32
    %219 = vector.broadcast %cst_117 : f32 to vector<4x8xf32>
    %220 = arith.mulf %219, %216 : vector<4x8xf32>
    %221 = arith.mulf %220, %216 : vector<4x8xf32>
    %222 = arith.mulf %221, %216 : vector<4x8xf32>
    %223 = arith.addf %216, %222 : vector<4x8xf32>
    %cst_118 = arith.constant 0.797884583 : f32
    %224 = vector.broadcast %cst_118 : f32 to vector<4x8xf32>
    %225 = arith.mulf %224, %223 : vector<4x8xf32>
    %226 = math.tanh %225 : vector<4x8xf32>
    %cst_119 = arith.constant 1.000000e+00 : f32
    %227 = vector.broadcast %cst_119 : f32 to vector<4x8xf32>
    %228 = arith.addf %227, %226 : vector<4x8xf32>
    %229 = arith.mulf %218, %228 : vector<4x8xf32>
    %c1_120 = arith.constant 1 : index
    %c0_121 = arith.constant 0 : index
    %c0_122 = arith.constant 0 : index
    %230 = vector.load %arg6[%c1_120, %c0_121, %c0_122] : memref<4x8x4xbf16, #tpu.memory_space<vmem>>, vector<1x8x4xbf16>
    %231 = vector.shape_cast %230 : vector<1x8x4xbf16> to vector<8x4xbf16>
    %232 = arith.truncf %229 : vector<4x8xf32> to vector<4x8xbf16>
    %cst_123 = arith.constant dense<0.000000e+00> : vector<8x8xf32>
    %233 = tpu.matmul %231, %232, %cst_123 {dimension_numbers = #tpu.dot_dimension_numbers<[1], [0], [0], [1], [0, 0, 1, 1], [], []>} : vector<8x4xbf16>, vector<4x8xbf16>, vector<8x8xf32> -> vector<8x8xf32>
    %234 = vector.extract_strided_slice %0 {offsets = [1, 0, 8], sizes = [1, 8, 8], strides = [1, 1, 1]} : vector<2x8x32xf32> to vector<1x8x8xf32>
    %235 = vector.shape_cast %234 : vector<1x8x8xf32> to vector<8x8xf32>
    %236 = arith.addf %235, %233 : vector<8x8xf32>
    %c1_124 = arith.constant 1 : index
    %c0_125 = arith.constant 0 : index
    %c0_126 = arith.constant 0 : index
    %237 = vector.load %arg7[%c1_124, %c0_125, %c0_126] : memref<4x8x1xf32, #tpu.memory_space<vmem>>, vector<1x8x1xf32>
    %238 = vector.shape_cast %237 : vector<1x8x1xf32> to vector<8x1xf32>
    %239 = vector.broadcast %238 : vector<8x1xf32> to vector<8x8xf32>
    %240 = arith.addf %236, %239 : vector<8x8xf32>
    %c1_127 = arith.constant 1 : index
    %c0_128 = arith.constant 0 : index
    %c8_129 = arith.constant 8 : index
    %241 = vector.load %arg15[%c1_127, %c0_128, %c8_129] : memref<2x8x32xf32, #tpu.memory_space<vmem>>, vector<1x8x8xf32>
    %242 = vector.shape_cast %241 : vector<1x8x8xf32> to vector<8x8xf32>
    %243 = vector.shape_cast %240 : vector<8x8xf32> to vector<1x8x8xf32>
    tpu.vector_store %arg15[%c1_127, %c0_128, %c8_129], %243 {strides = array<i32>} : memref<2x8x32xf32, #tpu.memory_space<vmem>>, vector<1x8x8xf32>,
    %244 = vector.extract_strided_slice %27 {offsets = [1, 0, 16], sizes = [1, 8, 8], strides = [1, 1, 1]} : vector<2x8x32xbf16> to vector<1x8x8xbf16>
    %245 = vector.shape_cast %244 : vector<1x8x8xbf16> to vector<8x8xbf16>
    %c2_130 = arith.constant 2 : index
    %c0_131 = arith.constant 0 : index
    %c0_132 = arith.constant 0 : index
    %246 = vector.load %arg4[%c2_130, %c0_131, %c0_132] : memref<4x4x8xbf16, #tpu.memory_space<vmem>>, vector<1x4x8xbf16>
    %247 = vector.shape_cast %246 : vector<1x4x8xbf16> to vector<4x8xbf16>
    %cst_133 = arith.constant dense<0.000000e+00> : vector<4x8xf32>
    %248 = tpu.matmul %247, %245, %cst_133 {dimension_numbers = #tpu.dot_dimension_numbers<[1], [0], [0], [1], [0, 0, 1, 1], [], []>} : vector<4x8xbf16>, vector<8x8xbf16>, vector<4x8xf32> -> vector<4x8xf32>
    %c2_134 = arith.constant 2 : index
    %c0_135 = arith.constant 0 : index
    %c0_136 = arith.constant 0 : index
    %249 = vector.load %arg5[%c2_134, %c0_135, %c0_136] : memref<4x4x1xf32, #tpu.memory_space<vmem>>, vector<1x4x1xf32>
    %250 = vector.shape_cast %249 : vector<1x4x1xf32> to vector<4x1xf32>
    %251 = vector.broadcast %250 : vector<4x1xf32> to vector<4x8xf32>
    %252 = arith.addf %248, %251 : vector<4x8xf32>
    %cst_137 = arith.constant 5.000000e-01 : f32
    %253 = vector.broadcast %cst_137 : f32 to vector<4x8xf32>
    %254 = arith.mulf %253, %252 : vector<4x8xf32>
    %cst_138 = arith.constant 4.471500e-02 : f32
    %255 = vector.broadcast %cst_138 : f32 to vector<4x8xf32>
    %256 = arith.mulf %255, %252 : vector<4x8xf32>
    %257 = arith.mulf %256, %252 : vector<4x8xf32>
    %258 = arith.mulf %257, %252 : vector<4x8xf32>
    %259 = arith.addf %252, %258 : vector<4x8xf32>
    %cst_139 = arith.constant 0.797884583 : f32
    %260 = vector.broadcast %cst_139 : f32 to vector<4x8xf32>
    %261 = arith.mulf %260, %259 : vector<4x8xf32>
    %262 = math.tanh %261 : vector<4x8xf32>
    %cst_140 = arith.constant 1.000000e+00 : f32
    %263 = vector.broadcast %cst_140 : f32 to vector<4x8xf32>
    %264 = arith.addf %263, %262 : vector<4x8xf32>
    %265 = arith.mulf %254, %264 : vector<4x8xf32>
    %c2_141 = arith.constant 2 : index
    %c0_142 = arith.constant 0 : index
    %c0_143 = arith.constant 0 : index
    %266 = vector.load %arg6[%c2_141, %c0_142, %c0_143] : memref<4x8x4xbf16, #tpu.memory_space<vmem>>, vector<1x8x4xbf16>
    %267 = vector.shape_cast %266 : vector<1x8x4xbf16> to vector<8x4xbf16>
    %268 = arith.truncf %265 : vector<4x8xf32> to vector<4x8xbf16>
    %cst_144 = arith.constant dense<0.000000e+00> : vector<8x8xf32>
    %269 = tpu.matmul %267, %268, %cst_144 {dimension_numbers = #tpu.dot_dimension_numbers<[1], [0], [0], [1], [0, 0, 1, 1], [], []>} : vector<8x4xbf16>, vector<4x8xbf16>, vector<8x8xf32> -> vector<8x8xf32>
    %270 = vector.extract_strided_slice %0 {offsets = [1, 0, 16], sizes = [1, 8, 8], strides = [1, 1, 1]} : vector<2x8x32xf32> to vector<1x8x8xf32>
    %271 = vector.shape_cast %270 : vector<1x8x8xf32> to vector<8x8xf32>
    %272 = arith.addf %271, %269 : vector<8x8xf32>
    %c2_145 = arith.constant 2 : index
    %c0_146 = arith.constant 0 : index
    %c0_147 = arith.constant 0 : index
    %273 = vector.load %arg7[%c2_145, %c0_146, %c0_147] : memref<4x8x1xf32, #tpu.memory_space<vmem>>, vector<1x8x1xf32>
    %274 = vector.shape_cast %273 : vector<1x8x1xf32> to vector<8x1xf32>
    %275 = vector.broadcast %274 : vector<8x1xf32> to vector<8x8xf32>
    %276 = arith.addf %272, %275 : vector<8x8xf32>
    %c1_148 = arith.constant 1 : index
    %c0_149 = arith.constant 0 : index
    %c16_150 = arith.constant 16 : index
    %277 = vector.load %arg15[%c1_148, %c0_149, %c16_150] : memref<2x8x32xf32, #tpu.memory_space<vmem>>, vector<1x8x8xf32>
    %278 = vector.shape_cast %277 : vector<1x8x8xf32> to vector<8x8xf32>
    %279 = vector.shape_cast %276 : vector<8x8xf32> to vector<1x8x8xf32>
    tpu.vector_store %arg15[%c1_148, %c0_149, %c16_150], %279 {strides = array<i32>} : memref<2x8x32xf32, #tpu.memory_space<vmem>>, vector<1x8x8xf32>,
    %280 = vector.extract_strided_slice %27 {offsets = [1, 0, 24], sizes = [1, 8, 8], strides = [1, 1, 1]} : vector<2x8x32xbf16> to vector<1x8x8xbf16>
    %281 = vector.shape_cast %280 : vector<1x8x8xbf16> to vector<8x8xbf16>
    %c3_151 = arith.constant 3 : index
    %c0_152 = arith.constant 0 : index
    %c0_153 = arith.constant 0 : index
    %282 = vector.load %arg4[%c3_151, %c0_152, %c0_153] : memref<4x4x8xbf16, #tpu.memory_space<vmem>>, vector<1x4x8xbf16>
    %283 = vector.shape_cast %282 : vector<1x4x8xbf16> to vector<4x8xbf16>
    %cst_154 = arith.constant dense<0.000000e+00> : vector<4x8xf32>
    %284 = tpu.matmul %283, %281, %cst_154 {dimension_numbers = #tpu.dot_dimension_numbers<[1], [0], [0], [1], [0, 0, 1, 1], [], []>} : vector<4x8xbf16>, vector<8x8xbf16>, vector<4x8xf32> -> vector<4x8xf32>
    %c3_155 = arith.constant 3 : index
    %c0_156 = arith.constant 0 : index
    %c0_157 = arith.constant 0 : index
    %285 = vector.load %arg5[%c3_155, %c0_156, %c0_157] : memref<4x4x1xf32, #tpu.memory_space<vmem>>, vector<1x4x1xf32>
    %286 = vector.shape_cast %285 : vector<1x4x1xf32> to vector<4x1xf32>
    %287 = vector.broadcast %286 : vector<4x1xf32> to vector<4x8xf32>
    %288 = arith.addf %284, %287 : vector<4x8xf32>
    %cst_158 = arith.constant 5.000000e-01 : f32
    %289 = vector.broadcast %cst_158 : f32 to vector<4x8xf32>
    %290 = arith.mulf %289, %288 : vector<4x8xf32>
    %cst_159 = arith.constant 4.471500e-02 : f32
    %291 = vector.broadcast %cst_159 : f32 to vector<4x8xf32>
    %292 = arith.mulf %291, %288 : vector<4x8xf32>
    %293 = arith.mulf %292, %288 : vector<4x8xf32>
    %294 = arith.mulf %293, %288 : vector<4x8xf32>
    %295 = arith.addf %288, %294 : vector<4x8xf32>
    %cst_160 = arith.constant 0.797884583 : f32
    %296 = vector.broadcast %cst_160 : f32 to vector<4x8xf32>
    %297 = arith.mulf %296, %295 : vector<4x8xf32>
    %298 = math.tanh %297 : vector<4x8xf32>
    %cst_161 = arith.constant 1.000000e+00 : f32
    %299 = vector.broadcast %cst_161 : f32 to vector<4x8xf32>
    %300 = arith.addf %299, %298 : vector<4x8xf32>
    %301 = arith.mulf %290, %300 : vector<4x8xf32>
    %c3_162 = arith.constant 3 : index
    %c0_163 = arith.constant 0 : index
    %c0_164 = arith.constant 0 : index
    %302 = vector.load %arg6[%c3_162, %c0_163, %c0_164] : memref<4x8x4xbf16, #tpu.memory_space<vmem>>, vector<1x8x4xbf16>
    %303 = vector.shape_cast %302 : vector<1x8x4xbf16> to vector<8x4xbf16>
    %304 = arith.truncf %301 : vector<4x8xf32> to vector<4x8xbf16>
    %cst_165 = arith.constant dense<0.000000e+00> : vector<8x8xf32>
    %305 = tpu.matmul %303, %304, %cst_165 {dimension_numbers = #tpu.dot_dimension_numbers<[1], [0], [0], [1], [0, 0, 1, 1], [], []>} : vector<8x4xbf16>, vector<4x8xbf16>, vector<8x8xf32> -> vector<8x8xf32>
    %306 = vector.extract_strided_slice %0 {offsets = [1, 0, 24], sizes = [1, 8, 8], strides = [1, 1, 1]} : vector<2x8x32xf32> to vector<1x8x8xf32>
    %307 = vector.shape_cast %306 : vector<1x8x8xf32> to vector<8x8xf32>
    %308 = arith.addf %307, %305 : vector<8x8xf32>
    %c3_166 = arith.constant 3 : index
    %c0_167 = arith.constant 0 : index
    %c0_168 = arith.constant 0 : index
    %309 = vector.load %arg7[%c3_166, %c0_167, %c0_168] : memref<4x8x1xf32, #tpu.memory_space<vmem>>, vector<1x8x1xf32>
    %310 = vector.shape_cast %309 : vector<1x8x1xf32> to vector<8x1xf32>
    %311 = vector.broadcast %310 : vector<8x1xf32> to vector<8x8xf32>
    %312 = arith.addf %308, %311 : vector<8x8xf32>
    %c1_169 = arith.constant 1 : index
    %c0_170 = arith.constant 0 : index
    %c24_171 = arith.constant 24 : index
    %313 = vector.load %arg15[%c1_169, %c0_170, %c24_171] : memref<2x8x32xf32, #tpu.memory_space<vmem>>, vector<1x8x8xf32>
    %314 = vector.shape_cast %313 : vector<1x8x8xf32> to vector<8x8xf32>
    %315 = vector.shape_cast %312 : vector<8x8xf32> to vector<1x8x8xf32>
    tpu.vector_store %arg15[%c1_169, %c0_170, %c24_171], %315 {strides = array<i32>} : memref<2x8x32xf32, #tpu.memory_space<vmem>>, vector<1x8x8xf32>,
    %c0_172 = arith.constant 0 : index
    %c0_173 = arith.constant 0 : index
    %c0_174 = arith.constant 0 : index
    %316 = vector.load %arg15[%c0_172, %c0_173, %c0_174] : memref<2x8x32xf32, #tpu.memory_space<vmem>>, vector<2x8x32xf32>
    %317 = vector.shape_cast %316 : vector<2x8x32xf32> to vector<16x32xf32>
    %c0_175 = arith.constant 0 : index
    %c0_176 = arith.constant 0 : index
    %318 = vector.load %arg8[%c0_175, %c0_176] : memref<1x32xf32, #tpu.memory_space<vmem>>, vector<1x32xf32>
    %c0_177 = arith.constant 0 : index
    %c0_178 = arith.constant 0 : index
    %319 = vector.load %arg9[%c0_177, %c0_178] : memref<1x32xf32, #tpu.memory_space<vmem>>, vector<1x32xf32>
    %cst_179 = arith.constant dense<0.000000e+00> : vector<16xf32>
    %320 = vector.multi_reduction <add>, %317, %cst_179 [1] : vector<16x32xf32> to vector<16xf32>
    %321 = vector.shape_cast %320 : vector<16xf32> to vector<16x1xf32>
    %cst_180 = arith.constant 3.200000e+01 : f32
    %322 = vector.broadcast %cst_180 : f32 to vector<16x1xf32>
    %323 = arith.divf %321, %322 : vector<16x1xf32>
    %324 = arith.mulf %317, %317 : vector<16x32xf32>
    %cst_181 = arith.constant dense<0.000000e+00> : vector<16xf32>
    %325 = vector.multi_reduction <add>, %324, %cst_181 [1] : vector<16x32xf32> to vector<16xf32>
    %326 = vector.shape_cast %325 : vector<16xf32> to vector<16x1xf32>
    %cst_182 = arith.constant 3.200000e+01 : f32
    %327 = vector.broadcast %cst_182 : f32 to vector<16x1xf32>
    %328 = arith.divf %326, %327 : vector<16x1xf32>
    %329 = arith.mulf %323, %323 : vector<16x1xf32>
    %330 = arith.subf %328, %329 : vector<16x1xf32>
    %331 = vector.broadcast %323 : vector<16x1xf32> to vector<16x32xf32>
    %332 = arith.subf %317, %331 : vector<16x32xf32>
    %cst_183 = arith.constant 9.99999997E-7 : f32
    %333 = vector.broadcast %cst_183 : f32 to vector<16x1xf32>
    %334 = arith.addf %330, %333 : vector<16x1xf32>
    %335 = math.rsqrt %334 : vector<16x1xf32>
    %336 = vector.broadcast %335 : vector<16x1xf32> to vector<16x32xf32>
    %337 = arith.mulf %332, %336 : vector<16x32xf32>
    %338 = vector.broadcast %318 : vector<1x32xf32> to vector<16x32xf32>
    %339 = arith.mulf %337, %338 : vector<16x32xf32>
    %340 = vector.broadcast %319 : vector<1x32xf32> to vector<16x32xf32>
    %341 = arith.addf %339, %340 : vector<16x32xf32>
    %342 = arith.truncf %341 : vector<16x32xf32> to vector<16x32xbf16>
    %c0_184 = arith.constant 0 : index
    %c0_185 = arith.constant 0 : index
    %343 = vector.load %arg10[%c0_184, %c0_185] : memref<32x128xbf16, #tpu.memory_space<vmem>>, vector<32x128xbf16>
    %cst_186 = arith.constant dense<0.000000e+00> : vector<16x128xf32>
    %344 = tpu.matmul %342, %343, %cst_186 {dimension_numbers = #tpu.dot_dimension_numbers<[1], [0], [0], [1], [0, 0, 1, 1], [], []>} : vector<16x32xbf16>, vector<32x128xbf16>, vector<16x128xf32> -> vector<16x128xf32>
    %c0_187 = arith.constant 0 : index
    %c0_188 = arith.constant 0 : index
    %345 = vector.load %arg11[%c0_187, %c0_188] : memref<1x128xf32, #tpu.memory_space<vmem>>, vector<1x128xf32>
    %346 = vector.broadcast %345 : vector<1x128xf32> to vector<16x128xf32>
    %347 = arith.addf %344, %346 : vector<16x128xf32>
    %cst_189 = arith.constant 5.000000e-01 : f32
    %348 = vector.broadcast %cst_189 : f32 to vector<16x128xf32>
    %349 = arith.mulf %348, %347 : vector<16x128xf32>
    %cst_190 = arith.constant 4.471500e-02 : f32
    %350 = vector.broadcast %cst_190 : f32 to vector<16x128xf32>
    %351 = arith.mulf %350, %347 : vector<16x128xf32>
    %352 = arith.mulf %351, %347 : vector<16x128xf32>
    %353 = arith.mulf %352, %347 : vector<16x128xf32>
    %354 = arith.addf %347, %353 : vector<16x128xf32>
    %cst_191 = arith.constant 0.797884583 : f32
    %355 = vector.broadcast %cst_191 : f32 to vector<16x128xf32>
    %356 = arith.mulf %355, %354 : vector<16x128xf32>
    %357 = math.tanh %356 : vector<16x128xf32>
    %cst_192 = arith.constant 1.000000e+00 : f32
    %358 = vector.broadcast %cst_192 : f32 to vector<16x128xf32>
    %359 = arith.addf %358, %357 : vector<16x128xf32>
    %360 = arith.mulf %349, %359 : vector<16x128xf32>
    %361 = arith.truncf %360 : vector<16x128xf32> to vector<16x128xbf16>
    %c0_193 = arith.constant 0 : index
    %c0_194 = arith.constant 0 : index
    %362 = vector.load %arg12[%c0_193, %c0_194] : memref<128x32xbf16, #tpu.memory_space<vmem>>, vector<128x32xbf16>
    %cst_195 = arith.constant dense<0.000000e+00> : vector<16x32xf32>
    %363 = tpu.matmul %361, %362, %cst_195 {dimension_numbers = #tpu.dot_dimension_numbers<[1], [0], [0], [1], [0, 0, 1, 1], [], []>} : vector<16x128xbf16>, vector<128x32xbf16>, vector<16x32xf32> -> vector<16x32xf32>
    %c0_196 = arith.constant 0 : index
    %c0_197 = arith.constant 0 : index
    %364 = vector.load %arg13[%c0_196, %c0_197] : memref<1x32xf32, #tpu.memory_space<vmem>>, vector<1x32xf32>
    %365 = vector.broadcast %364 : vector<1x32xf32> to vector<16x32xf32>
    %366 = arith.addf %363, %365 : vector<16x32xf32>
    %367 = arith.addf %317, %366 : vector<16x32xf32>
    %368 = vector.shape_cast %367 : vector<16x32xf32> to vector<2x8x32xf32>
    %c0_198 = arith.constant 0 : index
    %c0_199 = arith.constant 0 : index
    %c0_200 = arith.constant 0 : index
    %369 = vector.load %arg14[%c0_198, %c0_199, %c0_200] : memref<2x8x32xf32, #tpu.memory_space<vmem>>, vector<2x8x32xf32>
    tpu.vector_store %arg14[%c0_198, %c0_199, %c0_200], %368 {strides = array<i32>} : memref<2x8x32xf32, #tpu.memory_space<vmem>>, vector<2x8x32xf32>,
    return
  }
  func.func @transform_0(%arg0: i32) -> (i32, i32, i32) {
    %c0_i32 = arith.constant 0 : i32
    %c0_i32_0 = arith.constant 0 : i32
    %c0_i32_1 = arith.constant 0 : i32
    return %arg0, %c0_i32, %c0_i32_0 : i32, i32, i32
  }
  func.func @transform_1(%arg0: i32) -> (i32, i32) {
    %c0_i32 = arith.constant 0 : i32
    %c0_i32_0 = arith.constant 0 : i32
    %c0_i32_1 = arith.constant 0 : i32
    return %c0_i32, %c0_i32_0 : i32, i32
  }
  func.func @transform_2(%arg0: i32) -> (i32, i32) {
    %c0_i32 = arith.constant 0 : i32
    %c0_i32_0 = arith.constant 0 : i32
    %c0_i32_1 = arith.constant 0 : i32
    return %c0_i32, %c0_i32_0 : i32, i32
  }
  func.func @transform_3(%arg0: i32) -> (i32, i32, i32) {
    %c0_i32 = arith.constant 0 : i32
    %c0_i32_0 = arith.constant 0 : i32
    %c0_i32_1 = arith.constant 0 : i32
    %c0_i32_2 = arith.constant 0 : i32
    return %c0_i32, %c0_i32_0, %c0_i32_1 : i32, i32, i32
  }
  func.func @transform_4(%arg0: i32) -> (i32, i32, i32) {
    %c0_i32 = arith.constant 0 : i32
    %c0_i32_0 = arith.constant 0 : i32
    %c0_i32_1 = arith.constant 0 : i32
    %c0_i32_2 = arith.constant 0 : i32
    return %c0_i32, %c0_i32_0, %c0_i32_1 : i32, i32, i32
  }
  func.func @transform_5(%arg0: i32) -> (i32, i32, i32) {
    %c0_i32 = arith.constant 0 : i32
    %c0_i32_0 = arith.constant 0 : i32
    %c0_i32_1 = arith.constant 0 : i32
    %c0_i32_2 = arith.constant 0 : i32
    return %c0_i32, %c0_i32_0, %c0_i32_1 : i32, i32, i32
  }
  func.func @transform_6(%arg0: i32) -> (i32, i32, i32) {
    %c0_i32 = arith.constant 0 : i32
    %c0_i32_0 = arith.constant 0 : i32
    %c0_i32_1 = arith.constant 0 : i32
    %c0_i32_2 = arith.constant 0 : i32
    return %c0_i32, %c0_i32_0, %c0_i32_1 : i32, i32, i32
  }
  func.func @transform_7(%arg0: i32) -> (i32, i32) {
    %c0_i32 = arith.constant 0 : i32
    %c0_i32_0 = arith.constant 0 : i32
    %c0_i32_1 = arith.constant 0 : i32
    return %c0_i32, %c0_i32_0 : i32, i32
  }
  func.func @transform_8(%arg0: i32) -> (i32, i32) {
    %c0_i32 = arith.constant 0 : i32
    %c0_i32_0 = arith.constant 0 : i32
    %c0_i32_1 = arith.constant 0 : i32
    return %c0_i32, %c0_i32_0 : i32, i32
  }
  func.func @transform_9(%arg0: i32) -> (i32, i32) {
    %c0_i32 = arith.constant 0 : i32
    %c0_i32_0 = arith.constant 0 : i32
    %c0_i32_1 = arith.constant 0 : i32
    return %c0_i32, %c0_i32_0 : i32, i32
  }
  func.func @transform_10(%arg0: i32) -> (i32, i32) {
    %c0_i32 = arith.constant 0 : i32
    %c0_i32_0 = arith.constant 0 : i32
    %c0_i32_1 = arith.constant 0 : i32
    return %c0_i32, %c0_i32_0 : i32, i32
  }
  func.func @transform_11(%arg0: i32) -> (i32, i32) {
    %c0_i32 = arith.constant 0 : i32
    %c0_i32_0 = arith.constant 0 : i32
    %c0_i32_1 = arith.constant 0 : i32
    return %c0_i32, %c0_i32_0 : i32, i32
  }
  func.func @transform_12(%arg0: i32) -> (i32, i32) {
    %c0_i32 = arith.constant 0 : i32
    %c0_i32_0 = arith.constant 0 : i32
    %c0_i32_1 = arith.constant 0 : i32
    return %c0_i32, %c0_i32_0 : i32, i32
  }
  func.func @transform_13(%arg0: i32) -> (i32, i32, i32) {
    %c0_i32 = arith.constant 0 : i32
    %c0_i32_0 = arith.constant 0 : i32
    %c0_i32_1 = arith.constant 0 : i32
    return %arg0, %c0_i32, %c0_i32_0 : i32, i32, i32
  }
}

</mosaic_0001>

<llo_original>
// kernel: tpu_custom_call.1
$region0: #{tpu_custom_call.1}
  #allocation0 [shape = 'u32[]', space=smem, size = 0x4, offset = 0x4, fixed_abs, tag = 'smem constant byte address 0x4 - core index']
  #allocation1 [shape = 'u32[72,128]{1,0:T(1,128)}', space=vmem, size = 0x9000, scoped, tag = 'internal scratch']
  #allocation2 [shape = 'f32[2,8,32]{2,1,0:T(8,128)}', space=vmem, size = 0x2000, scoped, tag = 'scratch operand']
  %s0 = inlined_call_operand.vmem [shape: f32[4,8,32], index: 0, kind: input, shape index: {}]
  %s1 = inlined_call_operand.vmem [shape: f32[1,32], index: 1, kind: input, shape index: {}]
  %s2 = inlined_call_operand.vmem [shape: f32[1,32], index: 2, kind: input, shape index: {}]
  %s3 = inlined_call_operand.vmem [shape: bf16[4,4,8], index: 3, kind: input, shape index: {}]
  %s4 = inlined_call_operand.vmem [shape: f32[4,4,1], index: 4, kind: input, shape index: {}]
  %s5 = inlined_call_operand.vmem [shape: bf16[4,8,4], index: 5, kind: input, shape index: {}]
  %s6 = inlined_call_operand.vmem [shape: f32[4,8,1], index: 6, kind: input, shape index: {}]
  %s7 = inlined_call_operand.vmem [shape: f32[1,32], index: 7, kind: input, shape index: {}]
  %s8 = inlined_call_operand.vmem [shape: f32[1,32], index: 8, kind: input, shape index: {}]
  %s9 = inlined_call_operand.vmem [shape: bf16[32,128], index: 9, kind: input, shape index: {}]
  %s10 = inlined_call_operand.vmem [shape: f32[1,128], index: 10, kind: input, shape index: {}]
  %s11 = inlined_call_operand.vmem [shape: bf16[128,32], index: 11, kind: input, shape index: {}]
  %s12 = inlined_call_operand.vmem [shape: f32[1,32], index: 12, kind: input, shape index: {}]
  %s13 = inlined_call_operand.hbm [shape: f32[4,8,32], index: 13, kind: output, shape index: {}]
  %s14 = sld [smem:[#allocation0]]
  $region85: #{tpu_custom_call.1} parent=0
    _
  %s16 = ssub.s32 1, %s14
  %s17 = scalar_select 0, %s16, %s14
  $region1: #{tpu_custom_call.1} parent=0
    #allocation3 [shape = 'u8[16384]{0}', space=vmem, size = 0x4000, scoped, tag = 'output window, operand 0']
    #allocation4 [shape = 's32[2]{0}', space=sflag, size = 0x8, scoped, tag = 'scoped memory for tpu_custom_call.1']
    %18 = vsyncpa [#allocation4], 0
    %s19 = scalar_lea.sflag [#allocation4], 1
    %20 = vsyncpa %s19, 0
    loop: start=0, step=1, limit=4
    $region2: #{tpu_custom_call.1} parent=1 // loop_pre_header
      _
    $region3: #{tpu_custom_call.1} parent=1 // loop_header
      %s22 = sphi 0, %s26
      %p23 = scmp.ge.s32.totalorder %s22, 4
      %s32 = sphi 0, %s34
      %s35 = sphi 0, %s32
      %s36 = sphi 0, %s35
      %s52 = sphi 0, %s36
      %s56 = sphi 0, %s56
      %s58 = sphi 0, %s56
      %s59 = sphi 0, %s58
      %s73 = sphi 0, %s59
      %s77 = sphi 0, %s77
      %s79 = sphi 0, %s77
      %s80 = sphi 0, %s79
      %s94 = sphi 0, %s80
      %s98 = sphi 0, %s98
      %s100 = sphi 0, %s98
      %s101 = sphi 0, %s100
      %s115 = sphi 0, %s101
      %s119 = sphi 0, %s119
      %s121 = sphi 0, %s119
      %s122 = sphi 0, %s121
      %s136 = sphi 0, %s122
      %s140 = sphi 0, %s140
      %s142 = sphi 0, %s140
      %s143 = sphi 0, %s142
      %s157 = sphi 0, %s143
      %s161 = sphi 0, %s161
      %s163 = sphi 0, %s161
      %s164 = sphi 0, %s163
      %s178 = sphi 0, %s164
      %s182 = sphi 0, %s182
      %s184 = sphi 0, %s182
      %s185 = sphi 0, %s184
      %s199 = sphi 0, %s185
      %s203 = sphi 0, %s203
      %s205 = sphi 0, %s203
      %s206 = sphi 0, %s205
      %s220 = sphi 0, %s206
      %s224 = sphi 0, %s224
      %s226 = sphi 0, %s224
      %s227 = sphi 0, %s226
      %s241 = sphi 0, %s227
      %s245 = sphi 0, %s245
      %s247 = sphi 0, %s245
      %s248 = sphi 0, %s247
      %s262 = sphi 0, %s248
      %s266 = sphi 0, %s266
      %s268 = sphi 0, %s266
      %s269 = sphi 0, %s268
      %s283 = sphi 0, %s269
      %s287 = sphi 0, %s287
      %s289 = sphi 0, %s287
      %s290 = sphi 0, %s289
      %s304 = sphi 0, %s290
      %s310 = sphi 0, %s312
      %s313 = sphi 0, %s310
      %s314 = sphi 0, %s313
      %s330 = sphi 0, %s314
    $region4: #{tpu_custom_call.1} parent=1 // loop_header_branch
      %25 = sbr.rel (%p23) target = $region8
    $region5: #{tpu_custom_call.1} parent=1 // loop_body
      %s27 = ssub.s32 %s22, 1
      %s28 = ssub.s32 %s22, 2
      %s29 = sadd.s32 %s22, 1
      %s30 = ssub.s32 %s22, %s29
      %p31 = scmp.eq.s32.totalorder %s30, 0
      %s33 = sadd.s32 %s32, 1
      %s34 = scalar_select %p31, %s32, %s33
      %p37 = pneg %p31
      %p38 = scmp.eq.s32.totalorder %s22, 1
      %p39 = por %p37, %p38
      %p40 = scmp.ne.s32.totalorder %s32, %s35
      %p41 = scmp.eq.s32.totalorder %s22, 0
      %p42 = por %p40, %p41
      %p43 = scmp.ne.s32.totalorder %s32, %s35
      %p44 = scmp.eq.s32.totalorder %s27, 1
      %p45 = por %p43, %p44
      %p46 = scmp.ne.s32.totalorder %s35, %s36
      %p47 = scmp.eq.s32.totalorder %s27, 0
      %p48 = por %p46, %p47
      %p49 = scmp.ne.s32.totalorder %s35, %s36
      %p50 = scmp.eq.s32.totalorder %s28, 1
      %p51 = por %p49, %p50
      %p53 = scmp.ne.s32.totalorder %s36, %s52
      %p54 = scmp.eq.s32.totalorder %s28, 0
      %p55 = por %p53, %p54
      %s57 = sadd.s32 %s56, 1
      %p60 = scmp.eq.s32.totalorder %s22, 1
      %p61 = scmp.ne.s32.totalorder %s56, %s58
      %p62 = scmp.eq.s32.totalorder %s22, 0
      %p63 = por %p61, %p62
      %p64 = scmp.ne.s32.totalorder %s56, %s58
      %p65 = scmp.eq.s32.totalorder %s27, 1
      %p66 = por %p64, %p65
      %p67 = scmp.ne.s32.totalorder %s58, %s59
      %p68 = scmp.eq.s32.totalorder %s27, 0
      %p69 = por %p67, %p68
      %p70 = scmp.ne.s32.totalorder %s58, %s59
      %p71 = scmp.eq.s32.totalorder %s28, 1
      %p72 = por %p70, %p71
      %p74 = scmp.ne.s32.totalorder %s59, %s73
      %p75 = scmp.eq.s32.totalorder %s28, 0
      %p76 = por %p74, %p75
      %s78 = sadd.s32 %s77, 1
      %p81 = scmp.eq.s32.totalorder %s22, 1
      %p82 = scmp.ne.s32.totalorder %s77, %s79
      %p83 = scmp.eq.s32.totalorder %s22, 0
      %p84 = por %p82, %p83
      %p85 = scmp.ne.s32.totalorder %s77, %s79
      %p86 = scmp.eq.s32.totalorder %s27, 1
      %p87 = por %p85, %p86
      %p88 = scmp.ne.s32.totalorder %s79, %s80
      %p89 = scmp.eq.s32.totalorder %s27, 0
      %p90 = por %p88, %p89
      %p91 = scmp.ne.s32.totalorder %s79, %s80
      %p92 = scmp.eq.s32.totalorder %s28, 1
      %p93 = por %p91, %p92
      %p95 = scmp.ne.s32.totalorder %s80, %s94
      %p96 = scmp.eq.s32.totalorder %s28, 0
      %p97 = por %p95, %p96
      %s99 = sadd.s32 %s98, 1
      %p102 = scmp.eq.s32.totalorder %s22, 1
      %p103 = scmp.ne.s32.totalorder %s98, %s100
      %p104 = scmp.eq.s32.totalorder %s22, 0
      %p105 = por %p103, %p104
      %p106 = scmp.ne.s32.totalorder %s98, %s100
      %p107 = scmp.eq.s32.totalorder %s27, 1
      %p108 = por %p106, %p107
      %p109 = scmp.ne.s32.totalorder %s100, %s101
      %p110 = scmp.eq.s32.totalorder %s27, 0
      %p111 = por %p109, %p110
      %p112 = scmp.ne.s32.totalorder %s100, %s101
      %p113 = scmp.eq.s32.totalorder %s28, 1
      %p114 = por %p112, %p113
      %p116 = scmp.ne.s32.totalorder %s101, %s115
      %p117 = scmp.eq.s32.totalorder %s28, 0
      %p118 = por %p116, %p117
      %s120 = sadd.s32 %s119, 1
      %p123 = scmp.eq.s32.totalorder %s22, 1
      %p124 = scmp.ne.s32.totalorder %s119, %s121
      %p125 = scmp.eq.s32.totalorder %s22, 0
      %p126 = por %p124, %p125
      %p127 = scmp.ne.s32.totalorder %s119, %s121
      %p128 = scmp.eq.s32.totalorder %s27, 1
      %p129 = por %p127, %p128
      %p130 = scmp.ne.s32.totalorder %s121, %s122
      %p131 = scmp.eq.s32.totalorder %s27, 0
      %p132 = por %p130, %p131
      %p133 = scmp.ne.s32.totalorder %s121, %s122
      %p134 = scmp.eq.s32.totalorder %s28, 1
      %p135 = por %p133, %p134
      %p137 = scmp.ne.s32.totalorder %s122, %s136
      %p138 = scmp.eq.s32.totalorder %s28, 0
      %p139 = por %p137, %p138
      %s141 = sadd.s32 %s140, 1
      %p144 = scmp.eq.s32.totalorder %s22, 1
      %p145 = scmp.ne.s32.totalorder %s140, %s142
      %p146 = scmp.eq.s32.totalorder %s22, 0
      %p147 = por %p145, %p146
      %p148 = scmp.ne.s32.totalorder %s140, %s142
      %p149 = scmp.eq.s32.totalorder %s27, 1
      %p150 = por %p148, %p149
      %p151 = scmp.ne.s32.totalorder %s142, %s143
      %p152 = scmp.eq.s32.totalorder %s27, 0
      %p153 = por %p151, %p152
      %p154 = scmp.ne.s32.totalorder %s142, %s143
      %p155 = scmp.eq.s32.totalorder %s28, 1
      %p156 = por %p154, %p155
      %p158 = scmp.ne.s32.totalorder %s143, %s157
      %p159 = scmp.eq.s32.totalorder %s28, 0
      %p160 = por %p158, %p159
      %s162 = sadd.s32 %s161, 1
      %p165 = scmp.eq.s32.totalorder %s22, 1
      %p166 = scmp.ne.s32.totalorder %s161, %s163
      %p167 = scmp.eq.s32.totalorder %s22, 0
      %p168 = por %p166, %p167
      %p169 = scmp.ne.s32.totalorder %s161, %s163
      %p170 = scmp.eq.s32.totalorder %s27, 1
      %p171 = por %p169, %p170
      %p172 = scmp.ne.s32.totalorder %s163, %s164
      %p173 = scmp.eq.s32.totalorder %s27, 0
      %p174 = por %p172, %p173
      %p175 = scmp.ne.s32.totalorder %s163, %s164
      %p176 = scmp.eq.s32.totalorder %s28, 1
      %p177 = por %p175, %p176
      %p179 = scmp.ne.s32.totalorder %s164, %s178
      %p180 = scmp.eq.s32.totalorder %s28, 0
      %p181 = por %p179, %p180
      %s183 = sadd.s32 %s182, 1
      %p186 = scmp.eq.s32.totalorder %s22, 1
      %p187 = scmp.ne.s32.totalorder %s182, %s184
      %p188 = scmp.eq.s32.totalorder %s22, 0
      %p189 = por %p187, %p188
      %p190 = scmp.ne.s32.totalorder %s182, %s184
      %p191 = scmp.eq.s32.totalorder %s27, 1
      %p192 = por %p190, %p191
      %p193 = scmp.ne.s32.totalorder %s184, %s185
      %p194 = scmp.eq.s32.totalorder %s27, 0
      %p195 = por %p193, %p194
      %p196 = scmp.ne.s32.totalorder %s184, %s185
      %p197 = scmp.eq.s32.totalorder %s28, 1
      %p198 = por %p196, %p197
      %p200 = scmp.ne.s32.totalorder %s185, %s199
      %p201 = scmp.eq.s32.totalorder %s28, 0
      %p202 = por %p200, %p201
      %s204 = sadd.s32 %s203, 1
      %p207 = scmp.eq.s32.totalorder %s22, 1
      %p208 = scmp.ne.s32.totalorder %s203, %s205
      %p209 = scmp.eq.s32.totalorder %s22, 0
      %p210 = por %p208, %p209
      %p211 = scmp.ne.s32.totalorder %s203, %s205
      %p212 = scmp.eq.s32.totalorder %s27, 1
      %p213 = por %p211, %p212
      %p214 = scmp.ne.s32.totalorder %s205, %s206
      %p215 = scmp.eq.s32.totalorder %s27, 0
      %p216 = por %p214, %p215
      %p217 = scmp.ne.s32.totalorder %s205, %s206
      %p218 = scmp.eq.s32.totalorder %s28, 1
      %p219 = por %p217, %p218
      %p221 = scmp.ne.s32.totalorder %s206, %s220
      %p222 = scmp.eq.s32.totalorder %s28, 0
      %p223 = por %p221, %p222
      %s225 = sadd.s32 %s224, 1
      %p228 = scmp.eq.s32.totalorder %s22, 1
      %p229 = scmp.ne.s32.totalorder %s224, %s226
      %p230 = scmp.eq.s32.totalorder %s22, 0
      %p231 = por %p229, %p230
      %p232 = scmp.ne.s32.totalorder %s224, %s226
      %p233 = scmp.eq.s32.totalorder %s27, 1
      %p234 = por %p232, %p233
      %p235 = scmp.ne.s32.totalorder %s226, %s227
      %p236 = scmp.eq.s32.totalorder %s27, 0
      %p237 = por %p235, %p236
      %p238 = scmp.ne.s32.totalorder %s226, %s227
      %p239 = scmp.eq.s32.totalorder %s28, 1
      %p240 = por %p238, %p239
      %p242 = scmp.ne.s32.totalorder %s227, %s241
      %p243 = scmp.eq.s32.totalorder %s28, 0
      %p244 = por %p242, %p243
      %s246 = sadd.s32 %s245, 1
      %p249 = scmp.eq.s32.totalorder %s22, 1
      %p250 = scmp.ne.s32.totalorder %s245, %s247
      %p251 = scmp.eq.s32.totalorder %s22, 0
      %p252 = por %p250, %p251
      %p253 = scmp.ne.s32.totalorder %s245, %s247
      %p254 = scmp.eq.s32.totalorder %s27, 1
      %p255 = por %p253, %p254
      %p256 = scmp.ne.s32.totalorder %s247, %s248
      %p257 = scmp.eq.s32.totalorder %s27, 0
      %p258 = por %p256, %p257
      %p259 = scmp.ne.s32.totalorder %s247, %s248
      %p260 = scmp.eq.s32.totalorder %s28, 1
      %p261 = por %p259, %p260
      %p263 = scmp.ne.s32.totalorder %s248, %s262
      %p264 = scmp.eq.s32.totalorder %s28, 0
      %p265 = por %p263, %p264
      %s267 = sadd.s32 %s266, 1
      %p270 = scmp.eq.s32.totalorder %s22, 1
      %p271 = scmp.ne.s32.totalorder %s266, %s268
      %p272 = scmp.eq.s32.totalorder %s22, 0
      %p273 = por %p271, %p272
      %p274 = scmp.ne.s32.totalorder %s266, %s268
      %p275 = scmp.eq.s32.totalorder %s27, 1
      %p276 = por %p274, %p275
      %p277 = scmp.ne.s32.totalorder %s268, %s269
      %p278 = scmp.eq.s32.totalorder %s27, 0
      %p279 = por %p277, %p278
      %p280 = scmp.ne.s32.totalorder %s268, %s269
      %p281 = scmp.eq.s32.totalorder %s28, 1
      %p282 = por %p280, %p281
      %p284 = scmp.ne.s32.totalorder %s269, %s283
      %p285 = scmp.eq.s32.totalorder %s28, 0
      %p286 = por %p284, %p285
      %s288 = sadd.s32 %s287, 1
      %p291 = scmp.eq.s32.totalorder %s22, 1
      %p292 = scmp.ne.s32.totalorder %s287, %s289
      %p293 = scmp.eq.s32.totalorder %s22, 0
      %p294 = por %p292, %p293
      %p295 = scmp.ne.s32.totalorder %s287, %s289
      %p296 = scmp.eq.s32.totalorder %s27, 1
      %p297 = por %p295, %p296
      %p298 = scmp.ne.s32.totalorder %s289, %s290
      %p299 = scmp.eq.s32.totalorder %s27, 0
      %p300 = por %p298, %p299
      %p301 = scmp.ne.s32.totalorder %s289, %s290
      %p302 = scmp.eq.s32.totalorder %s28, 1
      %p303 = por %p301, %p302
      %p305 = scmp.ne.s32.totalorder %s290, %s304
      %p306 = scmp.eq.s32.totalorder %s28, 0
      %p307 = por %p305, %p306
      %s308 = ssub.s32 %s22, %s29
      %p309 = scmp.eq.s32.totalorder %s308, 0
      %s311 = sadd.s32 %s310, 1
      %s312 = scalar_select %p309, %s310, %s311
      %p315 = pneg %p309
      %p316 = scmp.eq.s32.totalorder %s22, 1
      %p317 = por %p315, %p316
      %p318 = scmp.ne.s32.totalorder %s310, %s313
      %p319 = scmp.eq.s32.totalorder %s22, 0
      %p320 = por %p318, %p319
      %p321 = scmp.ne.s32.totalorder %s310, %s313
      %p322 = scmp.eq.s32.totalorder %s27, 1
      %p323 = por %p321, %p322
      %p324 = scmp.ne.s32.totalorder %s313, %s314
      %p325 = scmp.eq.s32.totalorder %s27, 0
      %p326 = por %p324, %p325
      %p327 = scmp.ne.s32.totalorder %s313, %s314
      %p328 = scmp.eq.s32.totalorder %s28, 1
      %p329 = por %p327, %p328
      %p331 = scmp.ne.s32.totalorder %s314, %s330
      %p332 = scmp.eq.s32.totalorder %s28, 0
      %p333 = por %p331, %p332
      %p334 = scmp.le.s32.totalorder 1, %s22
      %p335 = scmp.lt.s32.totalorder %s22, 3
      %p336 = pnand %p334, %p335
      %p337 = pneg %p336
      // Predicated region
      $region9: #{tpu_custom_call.1} parent=5 // pred_check
        _
      $region10: #{tpu_custom_call.1} parent=5 // pred_check_branch
        %339 = sbr.rel (%p336) target = $region12
      $region11: #{tpu_custom_call.1} parent=5 // pred_region
        %s340 = ssub.s32 %s22, 1
        // Predicated region
        $region13: #{tpu_custom_call.1} parent=11 // pred_check
          %p341 = pneg %p69
        $region14: #{tpu_custom_call.1} parent=11 // pred_check_branch
          %343 = sbr.rel (%p341) target = $region16
        $region15: #{tpu_custom_call.1} parent=11 // pred_region
          _
        $region16: #{tpu_custom_call.1} parent=11 // pred_fallthru
          _
        // Predicated region
        $region17: #{tpu_custom_call.1} parent=11 // pred_check
          %p344 = pneg %p90
        $region18: #{tpu_custom_call.1} parent=11 // pred_check_branch
          %346 = sbr.rel (%p344) target = $region20
        $region19: #{tpu_custom_call.1} parent=11 // pred_region
          _
        $region20: #{tpu_custom_call.1} parent=11 // pred_fallthru
          _
        // Predicated region
        $region21: #{tpu_custom_call.1} parent=11 // pred_check
          %p347 = pneg %p111
        $region22: #{tpu_custom_call.1} parent=11 // pred_check_branch
          %349 = sbr.rel (%p347) target = $region24
        $region23: #{tpu_custom_call.1} parent=11 // pred_region
          _
        $region24: #{tpu_custom_call.1} parent=11 // pred_fallthru
          _
        // Predicated region
        $region25: #{tpu_custom_call.1} parent=11 // pred_check
          %p350 = pneg %p132
        $region26: #{tpu_custom_call.1} parent=11 // pred_check_branch
          %352 = sbr.rel (%p350) target = $region28
        $region27: #{tpu_custom_call.1} parent=11 // pred_region
          _
        $region28: #{tpu_custom_call.1} parent=11 // pred_fallthru
          _
        // Predicated region
        $region29: #{tpu_custom_call.1} parent=11 // pred_check
          %p353 = pneg %p153
        $region30: #{tpu_custom_call.1} parent=11 // pred_check_branch
          %355 = sbr.rel (%p353) target = $region32
        $region31: #{tpu_custom_call.1} parent=11 // pred_region
          _
        $region32: #{tpu_custom_call.1} parent=11 // pred_fallthru
          _
        // Predicated region
        $region33: #{tpu_custom_call.1} parent=11 // pred_check
          %p356 = pneg %p174
        $region34: #{tpu_custom_call.1} parent=11 // pred_check_branch
          %358 = sbr.rel (%p356) target = $region36
        $region35: #{tpu_custom_call.1} parent=11 // pred_region
          _
        $region36: #{tpu_custom_call.1} parent=11 // pred_fallthru
          _
        // Predicated region
        $region37: #{tpu_custom_call.1} parent=11 // pred_check
          %p359 = pneg %p195
        $region38: #{tpu_custom_call.1} parent=11 // pred_check_branch
          %361 = sbr.rel (%p359) target = $region40
        $region39: #{tpu_custom_call.1} parent=11 // pred_region
          _
        $region40: #{tpu_custom_call.1} parent=11 // pred_fallthru
          _
        // Predicated region
        $region41: #{tpu_custom_call.1} parent=11 // pred_check
          %p362 = pneg %p216
        $region42: #{tpu_custom_call.1} parent=11 // pred_check_branch
          %364 = sbr.rel (%p362) target = $region44
        $region43: #{tpu_custom_call.1} parent=11 // pred_region
          _
        $region44: #{tpu_custom_call.1} parent=11 // pred_fallthru
          _
        // Predicated region
        $region45: #{tpu_custom_call.1} parent=11 // pred_check
          %p365 = pneg %p237
        $region46: #{tpu_custom_call.1} parent=11 // pred_check_branch
          %367 = sbr.rel (%p365) target = $region48
        $region47: #{tpu_custom_call.1} parent=11 // pred_region
          _
        $region48: #{tpu_custom_call.1} parent=11 // pred_fallthru
          _
        // Predicated region
        $region49: #{tpu_custom_call.1} parent=11 // pred_check
          %p368 = pneg %p258
        $region50: #{tpu_custom_call.1} parent=11 // pred_check_branch
          %370 = sbr.rel (%p368) target = $region52
        $region51: #{tpu_custom_call.1} parent=11 // pred_region
          _
        $region52: #{tpu_custom_call.1} parent=11 // pred_fallthru
          _
        // Predicated region
        $region53: #{tpu_custom_call.1} parent=11 // pred_check
          %p371 = pneg %p279
        $region54: #{tpu_custom_call.1} parent=11 // pred_check_branch
          %373 = sbr.rel (%p371) target = $region56
        $region55: #{tpu_custom_call.1} parent=11 // pred_region
          _
        $region56: #{tpu_custom_call.1} parent=11 // pred_fallthru
          _
        // Predicated region
        $region57: #{tpu_custom_call.1} parent=11 // pred_check
          %p374 = pneg %p300
        $region58: #{tpu_custom_call.1} parent=11 // pred_check_branch
          %376 = sbr.rel (%p374) target = $region60
        $region59: #{tpu_custom_call.1} parent=11 // pred_region
          _
        $region60: #{tpu_custom_call.1} parent=11 // pred_fallthru
          _
      $region12: #{tpu_custom_call.1} parent=5 // pred_fallthru
        _
      %p377 = scmp.lt.s32.totalorder %s22, 2
      // Predicated region
      $region61: #{tpu_custom_call.1} parent=5 // pred_check
        %p378 = pneg %p377
      $region62: #{tpu_custom_call.1} parent=5 // pred_check_branch
        %380 = sbr.rel (%p378) target = $region64
      $region63: #{tpu_custom_call.1} parent=5 // pred_region
        // Predicated region
        $region65: #{tpu_custom_call.1} parent=63 // pred_check
          %p381 = pneg %p42
        $region66: #{tpu_custom_call.1} parent=63 // pred_check_branch
          %383 = sbr.rel (%p381) target = $region68
        $region67: #{tpu_custom_call.1} parent=63 // pred_region
          %s384 = smul.u32 2, %s22
          %p385 = scmp.lt.s32.totalorder %s384, 3
          %s386 = scalar_select %p385, %s384, 3
          %s387 = smul.addr %s386, 8
          %s388 = scalar_lea.vmem %s0, %s387
          %s389 = smul.u32 2, %s22
        $region68: #{tpu_custom_call.1} parent=63 // pred_fallthru
          _
      $region64: #{tpu_custom_call.1} parent=5 // pred_fallthru
        _
      %p390 = scmp.le.s32.totalorder 1, %s22
      %p391 = scmp.lt.s32.totalorder %s22, 3
      %p392 = pnand %p390, %p391
      %p393 = pneg %p392
      // Predicated region
      $region69: #{tpu_custom_call.1} parent=5 // pred_check
        _
      $region70: #{tpu_custom_call.1} parent=5 // pred_check_branch
        %395 = sbr.rel (%p392) target = $region72
      $region71: #{tpu_custom_call.1} parent=5 // pred_region
        %s396 = ssub.s32 %s22, 1
        %s397 = smul.u32 2, %s27
        %p398 = scmp.lt.s32.totalorder %s397, 3
        %s399 = scalar_select %p398, %s397, 3
        %s400 = smul.addr %s399, 8
        %s401 = scalar_lea.vmem %s0, %s400
        %p402 = pneg %p48
        %p403 = pneg %p45
        %p404 = pneg %p69
        %p405 = pneg %p66
        %p406 = pneg %p90
        %p407 = pneg %p87
        %p408 = pneg %p111
        %p409 = pneg %p108
        %p410 = pneg %p132
        %p411 = pneg %p129
        %p412 = pneg %p153
        %p413 = pneg %p150
        %p414 = pneg %p174
        %p415 = pneg %p171
        %p416 = pneg %p195
        %p417 = pneg %p192
        %p418 = pneg %p216
        %p419 = pneg %p213
        %p420 = pneg %p237
        %p421 = pneg %p234
        %p422 = pneg %p258
        %p423 = pneg %p255
        %p424 = pneg %p279
        %p425 = pneg %p276
        %p426 = pneg %p300
        %p427 = pneg %p297
        %p428 = pneg %p326
        %p429 = pneg %p323
        %s430 = sand.u32 %s313, 1
        %s431 = scalar_lea.sflag [#allocation4], %s430
        %s432 = sand.u32 %s313, 1
        %s433 = smul.addr %s432, 16
        %s434 = scalar_lea.vmem [#allocation3], %s433
        %s435 = smul.u32 2, %s27
        %p436 = scmp.lt.s32.totalorder %s435, 3
        %s437 = scalar_select %p436, %s435, 3
        %s438 = smul.addr %s437, 8
        %s439 = scalar_lea.vmem %s0, %s438
        %s440 = smul.u32 2, %s27
        %s441 = smul.u32 2, %s27
        %v443 = vld [vmem:[%s439] sm:$0xff]
        %v444 = vld [vmem:[%s439 + $0x8] sm:$0xff]
        %v445 = vld [vmem:[%s1] sm:$0x1]
        %v446 = vld [vmem:[%s2] sm:$0x1]
        %vm447 = vcmask 261120
        %v448 = vsel %vm447, %v443, 0.0
        %449 = vadd.xlane.f32.xlu0 %v448
        %v450 = vpop.xlane.xlu0 %449
        %v451 = vsel %vm447, %v444, 0.0
        %452 = vadd.xlane.f32.xlu0 %v451
        %v453 = vpop.xlane.xlu0 %452
        %v454 = vrcp.pop 32.0
        %v455 = vmul.f32 32.0, %v454
        %v456 = vsub.f32 1.0, %v455
        %v457 = vmul.f32 %v454, %v456
        %v458 = vadd.f32 %v454, %v457
        %vm459 = vweird.f32 %v454
        %v460 = vsel %vm459, %v454, %v458
        %v461 = vmul.f32 %v450, %v460
        %v462 = vmul.f32 %v453, %v460
        %v463 = vmul.f32 %v443, %v443
        %v464 = vmul.f32 %v444, %v444
        %v465 = vsel %vm447, %v463, 0.0
        %466 = vadd.xlane.f32.xlu0 %v465
        %v467 = vpop.xlane.xlu0 %466
        %v468 = vsel %vm447, %v464, 0.0
        %469 = vadd.xlane.f32.xlu0 %v468
        %v470 = vpop.xlane.xlu0 %469
        %v471 = vmul.f32 %v467, %v460
        %v472 = vmul.f32 %v470, %v460
        %v473 = vmul.f32 %v461, %v461
        %v474 = vmul.f32 %v462, %v462
        %v475 = vsub.f32 %v471, %v473
        %v476 = vsub.f32 %v472, %v474
        %v477 = vsub.f32 %v443, %v461
        %v478 = vsub.f32 %v444, %v462
        %v479 = vadd.f32 %v475, 1e-06
        %v480 = vadd.f32 %v476, 1e-06
        %v481 = vrsqrt.pop %v479
        %v482 = vmul.f32 %v481, %v479
        %v483 = vmul.f32 %v482, %v481
        %v484 = vmul.f32 0.5, %v483
        %v485 = vsub.f32 1.5, %v484
        %v486 = vmul.f32 %v481, %v485
        %vm487 = vweird.f32 %v479
        %vm488 = vweird.f32 %v481
        %vm489 = vmor %vm487, %vm488
        %v490 = vsel %vm489, %v481, %v486
        %v491 = vrsqrt.pop %v480
        %v492 = vmul.f32 %v491, %v480
        %v493 = vmul.f32 %v492, %v491
        %v494 = vmul.f32 0.5, %v493
        %v495 = vsub.f32 1.5, %v494
        %v496 = vmul.f32 %v491, %v495
        %vm497 = vweird.f32 %v480
        %vm498 = vweird.f32 %v491
        %vm499 = vmor %vm497, %vm498
        %v500 = vsel %vm499, %v491, %v496
        %v501 = vmul.f32 %v477, %v490
        %v502 = vmul.f32 %v478, %v500
        %v504 = vperm.slane %v445, 0
        %v506 = vmul.f32 %v501, %v504
        %v507 = vmul.f32 %v502, %v504
        %v509 = vperm.slane %v446, 0
        %v511 = vadd.f32 %v506, %v509
        %v512 = vadd.f32 %v507, %v509
        %v513 = vpack.c.bf16 %v511, %v511
        %v514 = vpack.c.bf16 %v512, %v512
        %v515 = vld [vmem:[%s3] sm:$0x3]
        %v516 = vld [vmem:[%s4] sm:$0xf]
        %518 = vset.pattern.permute.xlu0 0
        %519 = vperm.xlu0 %518, %v516
        %v520 = vpop.permute.xlu0 %519
        %vm522 = vcmask 64512
        %v524 = vsel %vm522, %v515, 0
        %vm526 = vcmask 1043456
        %v528 = vsel %vm526, %v513, 0
        %530 = vmatpush.bf16.msra.mxu0 0
        %531 = vmatpush.bf16.msra.mxu0 0
        %532 = vmatpush.bf16.msra.mxu0 0
        %533 = vmatpush.bf16.msra.mxu0 0
        %534 = vmatpush.bf16.msra.mxu0 0
        %535 = vmatpush.bf16.msra.mxu0 0
        %536 = vmatpush.bf16.msra.mxu0 0
        %537 = vmatpush.bf16.msra.mxu0 %v528
        %538 = vmatmul.bf16.gmra.mxu0 %v524
        %v539 = vpop.f32.mrf.mxu0
        %v540 = vadd.f32 %v520, %v539
        %v541 = vpop.f32.mrf.mxu0
        %542 = vdwg.mxu0
        %v543 = vmul.f32 %v540, 0.5
        %v544 = vmul.f32 %v540, 0.044715
        %v545 = vmul.f32 %v544, %v540
        %v546 = vmul.f32 %v545, %v540
        %v547 = vadd.f32 %v540, %v546
        %v548 = vmul.f32 %v547, 0.7978846
        %v549 = vtanh.pop %v548
        %v550 = vadd.f32 %v549, 1.0
        %v551 = vmul.f32 %v543, %v550
        %v552 = vld [vmem:[%s5] sm:$0xf]
        %v553 = vpack.c.bf16 %v551, %v551
        %vm554 = vcmask 31744
        %v556 = vsel %vm554, %v552, 0
        %vm558 = vcmask 1041408
        %v560 = vsel %vm558, %v553, 0
        %562 = vmatpush.bf16.msra.mxu0 0
        %563 = vmatpush.bf16.msra.mxu0 0
        %564 = vmatpush.bf16.msra.mxu0 0
        %565 = vmatpush.bf16.msra.mxu0 0
        %566 = vmatpush.bf16.msra.mxu0 0
        %567 = vmatpush.bf16.msra.mxu0 0
        %568 = vmatpush.bf16.msra.mxu0 0
        %569 = vmatpush.bf16.msra.mxu0 %v560
        %570 = vmatmul.bf16.gmra.mxu0 %v556
        %v571 = vpop.f32.mrf.mxu0
        %v572 = vadd.f32 0.0, %v571
        %v573 = vpop.f32.mrf.mxu0
        %574 = vdwg.mxu0
        %v575 = vadd.f32 %v443, %v572
        %v576 = vld [vmem:[%s6] sm:$0xff]
        %578 = vset.pattern.permute.xlu0 0
        %579 = vperm.xlu0 %578, %v576
        %v580 = vpop.permute.xlu0 %579
        %v582 = vadd.f32 %v575, %v580
        %583 = vst.msk [vmem:[#allocation2] sm:$0xff] %vm522, %v582
        %s584 = scalar_lea.vmem %s3, 2
        %v585 = vld [vmem:[%s584] sm:$0x3]
        %s586 = scalar_lea.vmem %s4, 4
        %v587 = vld [vmem:[%s586] sm:$0xf]
        %589 = vset.pattern.permute.xlu0 0
        %590 = vperm.xlu0 %589, %v587
        %v591 = vpop.permute.xlu0 %590
        %v594 = vunpack.c.l.b16 %v513
        %v595 = vpack.c.b16 %v594, %v594
        %596 = vrot.lane.b32.xlu0 %v595, 120
        %v597 = vpop.permute.xlu0 %596
        %v599 = vsel %vm522, %v585, 0
        %v602 = vsel %vm526, %v597, 0
        %604 = vmatpush.bf16.msra.mxu0 0
        %605 = vmatpush.bf16.msra.mxu0 0
        %606 = vmatpush.bf16.msra.mxu0 0
        %607 = vmatpush.bf16.msra.mxu0 0
        %608 = vmatpush.bf16.msra.mxu0 0
        %609 = vmatpush.bf16.msra.mxu0 0
        %610 = vmatpush.bf16.msra.mxu0 0
        %611 = vmatpush.bf16.msra.mxu0 %v602
        %612 = vmatmul.bf16.gmra.mxu0 %v599
        %v613 = vpop.f32.mrf.mxu0
        %v614 = vadd.f32 %v591, %v613
        %v615 = vpop.f32.mrf.mxu0
        %616 = vdwg.mxu0
        %v617 = vmul.f32 %v614, 0.5
        %v618 = vmul.f32 %v614, 0.044715
        %v619 = vmul.f32 %v618, %v614
        %v620 = vmul.f32 %v619, %v614
        %v621 = vadd.f32 %v614, %v620
        %v622 = vmul.f32 %v621, 0.7978846
        %v623 = vtanh.pop %v622
        %v624 = vadd.f32 %v623, 1.0
        %v625 = vmul.f32 %v617, %v624
        %s626 = scalar_lea.vmem %s5, 4
        %v627 = vld [vmem:[%s626] sm:$0xf]
        %v628 = vpack.c.bf16 %v625, %v625
        %v630 = vsel %vm554, %v627, 0
        %v633 = vsel %vm558, %v628, 0
        %635 = vmatpush.bf16.msra.mxu0 0
        %636 = vmatpush.bf16.msra.mxu0 0
        %637 = vmatpush.bf16.msra.mxu0 0
        %638 = vmatpush.bf16.msra.mxu0 0
        %639 = vmatpush.bf16.msra.mxu0 0
        %640 = vmatpush.bf16.msra.mxu0 0
        %641 = vmatpush.bf16.msra.mxu0 0
        %642 = vmatpush.bf16.msra.mxu0 %v633
        %643 = vmatmul.bf16.gmra.mxu0 %v630
        %v644 = vpop.f32.mrf.mxu0
        %v645 = vadd.f32 0.0, %v644
        %v646 = vpop.f32.mrf.mxu0
        %647 = vdwg.mxu0
        %649 = vrot.lane.b32.xlu0 %v645, 8
        %v650 = vpop.permute.xlu0 %649
        %v652 = vadd.f32 %v443, %v650
        %s653 = scalar_lea.vmem %s6, 8
        %v654 = vld [vmem:[%s653] sm:$0xff]
        %656 = vset.pattern.permute.xlu0 0
        %657 = vperm.xlu0 %656, %v654
        %v658 = vpop.permute.xlu0 %657
        %v660 = vadd.f32 %v652, %v658
        %vm661 = vcmask 130112
        %662 = vst.msk [vmem:[#allocation2] sm:$0xff] %vm661, %v660
        %s663 = scalar_lea.vmem %s3, 4
        %v664 = vld [vmem:[%s663] sm:$0x3]
        %s665 = scalar_lea.vmem %s4, 8
        %v666 = vld [vmem:[%s665] sm:$0xf]
        %668 = vset.pattern.permute.xlu0 0
        %669 = vperm.xlu0 %668, %v666
        %v670 = vpop.permute.xlu0 %669
        %672 = vrot.lane.b32.xlu0 %v595, 112
        %v673 = vpop.permute.xlu0 %672
        %v675 = vsel %vm522, %v664, 0
        %v678 = vsel %vm526, %v673, 0
        %680 = vmatpush.bf16.msra.mxu0 0
        %681 = vmatpush.bf16.msra.mxu0 0
        %682 = vmatpush.bf16.msra.mxu0 0
        %683 = vmatpush.bf16.msra.mxu0 0
        %684 = vmatpush.bf16.msra.mxu0 0
        %685 = vmatpush.bf16.msra.mxu0 0
        %686 = vmatpush.bf16.msra.mxu0 0
        %687 = vmatpush.bf16.msra.mxu0 %v678
        %688 = vmatmul.bf16.gmra.mxu0 %v675
        %v689 = vpop.f32.mrf.mxu0
        %v690 = vadd.f32 %v670, %v689
        %v691 = vpop.f32.mrf.mxu0
        %692 = vdwg.mxu0
        %v693 = vmul.f32 %v690, 0.5
        %v694 = vmul.f32 %v690, 0.044715
        %v695 = vmul.f32 %v694, %v690
        %v696 = vmul.f32 %v695, %v690
        %v697 = vadd.f32 %v690, %v696
        %v698 = vmul.f32 %v697, 0.7978846
        %v699 = vtanh.pop %v698
        %v700 = vadd.f32 %v699, 1.0
        %v701 = vmul.f32 %v693, %v700
        %s702 = scalar_lea.vmem %s5, 8
        %v703 = vld [vmem:[%s702] sm:$0xf]
        %v704 = vpack.c.bf16 %v701, %v701
        %v706 = vsel %vm554, %v703, 0
        %v709 = vsel %vm558, %v704, 0
        %711 = vmatpush.bf16.msra.mxu0 0
        %712 = vmatpush.bf16.msra.mxu0 0
        %713 = vmatpush.bf16.msra.mxu0 0
        %714 = vmatpush.bf16.msra.mxu0 0
        %715 = vmatpush.bf16.msra.mxu0 0
        %716 = vmatpush.bf16.msra.mxu0 0
        %717 = vmatpush.bf16.msra.mxu0 0
        %718 = vmatpush.bf16.msra.mxu0 %v709
        %719 = vmatmul.bf16.gmra.mxu0 %v706
        %v720 = vpop.f32.mrf.mxu0
        %v721 = vadd.f32 0.0, %v720
        %v722 = vpop.f32.mrf.mxu0
        %723 = vdwg.mxu0
        %725 = vrot.lane.b32.xlu0 %v721, 16
        %v726 = vpop.permute.xlu0 %725
        %v728 = vadd.f32 %v443, %v726
        %s729 = scalar_lea.vmem %s6, 16
        %v730 = vld [vmem:[%s729] sm:$0xff]
        %732 = vset.pattern.permute.xlu0 0
        %733 = vperm.xlu0 %732, %v730
        %v734 = vpop.permute.xlu0 %733
        %v736 = vadd.f32 %v728, %v734
        %vm737 = vcmask 195712
        %738 = vst.msk [vmem:[#allocation2] sm:$0xff] %vm737, %v736
        %s739 = scalar_lea.vmem %s3, 6
        %v740 = vld [vmem:[%s739] sm:$0x3]
        %s741 = scalar_lea.vmem %s4, 12
        %v742 = vld [vmem:[%s741] sm:$0xf]
        %744 = vset.pattern.permute.xlu0 0
        %745 = vperm.xlu0 %744, %v742
        %v746 = vpop.permute.xlu0 %745
        %748 = vrot.lane.b32.xlu0 %v595, 104
        %v749 = vpop.permute.xlu0 %748
        %v751 = vsel %vm522, %v740, 0
        %v754 = vsel %vm526, %v749, 0
        %756 = vmatpush.bf16.msra.mxu0 0
        %757 = vmatpush.bf16.msra.mxu0 0
        %758 = vmatpush.bf16.msra.mxu0 0
        %759 = vmatpush.bf16.msra.mxu0 0
        %760 = vmatpush.bf16.msra.mxu0 0
        %761 = vmatpush.bf16.msra.mxu0 0
        %762 = vmatpush.bf16.msra.mxu0 0
        %763 = vmatpush.bf16.msra.mxu0 %v754
        %764 = vmatmul.bf16.gmra.mxu0 %v751
        %v765 = vpop.f32.mrf.mxu0
        %v766 = vadd.f32 %v746, %v765
        %v767 = vpop.f32.mrf.mxu0
        %768 = vdwg.mxu0
        %v769 = vmul.f32 %v766, 0.5
        %v770 = vmul.f32 %v766, 0.044715
        %v771 = vmul.f32 %v770, %v766
        %v772 = vmul.f32 %v771, %v766
        %v773 = vadd.f32 %v766, %v772
        %v774 = vmul.f32 %v773, 0.7978846
        %v775 = vtanh.pop %v774
        %v776 = vadd.f32 %v775, 1.0
        %v777 = vmul.f32 %v769, %v776
        %s778 = scalar_lea.vmem %s5, 12
        %v779 = vld [vmem:[%s778] sm:$0xf]
        %v780 = vpack.c.bf16 %v777, %v777
        %v782 = vsel %vm554, %v779, 0
        %v785 = vsel %vm558, %v780, 0
        %787 = vmatpush.bf16.msra.mxu0 0
        %788 = vmatpush.bf16.msra.mxu0 0
        %789 = vmatpush.bf16.msra.mxu0 0
        %790 = vmatpush.bf16.msra.mxu0 0
        %791 = vmatpush.bf16.msra.mxu0 0
        %792 = vmatpush.bf16.msra.mxu0 0
        %793 = vmatpush.bf16.msra.mxu0 0
        %794 = vmatpush.bf16.msra.mxu0 %v785
        %795 = vmatmul.bf16.gmra.mxu0 %v782
        %v796 = vpop.f32.mrf.mxu0
        %v797 = vadd.f32 0.0, %v796
        %v798 = vpop.f32.mrf.mxu0
        %799 = vdwg.mxu0
        %801 = vrot.lane.b32.xlu0 %v797, 24
        %v802 = vpop.permute.xlu0 %801
        %v804 = vadd.f32 %v443, %v802
        %s805 = scalar_lea.vmem %s6, 24
        %v806 = vld [vmem:[%s805] sm:$0xff]
        %808 = vset.pattern.permute.xlu0 0
        %809 = vperm.xlu0 %808, %v806
        %v810 = vpop.permute.xlu0 %809
        %v812 = vadd.f32 %v804, %v810
        %vm813 = vcmask 261312
        %814 = vst.msk [vmem:[#allocation2] sm:$0xff] %vm813, %v812
        %v815 = vld [vmem:[%s3] sm:$0x3]
        %v816 = vld [vmem:[%s4] sm:$0xf]
        %818 = vset.pattern.permute.xlu0 0
        %819 = vperm.xlu0 %818, %v816
        %v820 = vpop.permute.xlu0 %819
        %v823 = vsel %vm522, %v815, 0
        %v826 = vsel %vm526, %v514, 0
        %828 = vmatpush.bf16.msra.mxu0 0
        %829 = vmatpush.bf16.msra.mxu0 0
        %830 = vmatpush.bf16.msra.mxu0 0
        %831 = vmatpush.bf16.msra.mxu0 0
        %832 = vmatpush.bf16.msra.mxu0 0
        %833 = vmatpush.bf16.msra.mxu0 0
        %834 = vmatpush.bf16.msra.mxu0 0
        %835 = vmatpush.bf16.msra.mxu0 %v826
        %836 = vmatmul.bf16.gmra.mxu0 %v823
        %v837 = vpop.f32.mrf.mxu0
        %v838 = vadd.f32 %v820, %v837
        %v839 = vpop.f32.mrf.mxu0
        %840 = vdwg.mxu0
        %v841 = vmul.f32 %v838, 0.5
        %v842 = vmul.f32 %v838, 0.044715
        %v843 = vmul.f32 %v842, %v838
        %v844 = vmul.f32 %v843, %v838
        %v845 = vadd.f32 %v838, %v844
        %v846 = vmul.f32 %v845, 0.7978846
        %v847 = vtanh.pop %v846
        %v848 = vadd.f32 %v847, 1.0
        %v849 = vmul.f32 %v841, %v848
        %v850 = vld [vmem:[%s5] sm:$0xf]
        %v851 = vpack.c.bf16 %v849, %v849
        %v853 = vsel %vm554, %v850, 0
        %v856 = vsel %vm558, %v851, 0
        %858 = vmatpush.bf16.msra.mxu0 0
        %859 = vmatpush.bf16.msra.mxu0 0
        %860 = vmatpush.bf16.msra.mxu0 0
        %861 = vmatpush.bf16.msra.mxu0 0
        %862 = vmatpush.bf16.msra.mxu0 0
        %863 = vmatpush.bf16.msra.mxu0 0
        %864 = vmatpush.bf16.msra.mxu0 0
        %865 = vmatpush.bf16.msra.mxu0 %v856
        %866 = vmatmul.bf16.gmra.mxu0 %v853
        %v867 = vpop.f32.mrf.mxu0
        %v868 = vadd.f32 0.0, %v867
        %v869 = vpop.f32.mrf.mxu0
        %870 = vdwg.mxu0
        %v871 = vadd.f32 %v444, %v868
        %v872 = vld [vmem:[%s6] sm:$0xff]
        %874 = vset.pattern.permute.xlu0 0
        %875 = vperm.xlu0 %874, %v872
        %v876 = vpop.permute.xlu0 %875
        %v878 = vadd.f32 %v871, %v876
        %s879 = scalar_lea.vmem [#allocation2], 8
        %880 = vst.msk [vmem:[%s879] sm:$0xff] %vm522, %v878
        %v881 = vld [vmem:[%s584] sm:$0x3]
        %v882 = vld [vmem:[%s586] sm:$0xf]
        %884 = vset.pattern.permute.xlu0 0
        %885 = vperm.xlu0 %884, %v882
        %v886 = vpop.permute.xlu0 %885
        %v889 = vunpack.c.l.b16 %v514
        %v890 = vpack.c.b16 %v889, %v889
        %891 = vrot.lane.b32.xlu0 %v890, 120
        %v892 = vpop.permute.xlu0 %891
        %v894 = vsel %vm522, %v881, 0
        %v897 = vsel %vm526, %v892, 0
        %899 = vmatpush.bf16.msra.mxu0 0
        %900 = vmatpush.bf16.msra.mxu0 0
        %901 = vmatpush.bf16.msra.mxu0 0
        %902 = vmatpush.bf16.msra.mxu0 0
        %903 = vmatpush.bf16.msra.mxu0 0
        %904 = vmatpush.bf16.msra.mxu0 0
        %905 = vmatpush.bf16.msra.mxu0 0
        %906 = vmatpush.bf16.msra.mxu0 %v897
        %907 = vmatmul.bf16.gmra.mxu0 %v894
        %v908 = vpop.f32.mrf.mxu0
        %v909 = vadd.f32 %v886, %v908
        %v910 = vpop.f32.mrf.mxu0
        %911 = vdwg.mxu0
        %v912 = vmul.f32 %v909, 0.5
        %v913 = vmul.f32 %v909, 0.044715
        %v914 = vmul.f32 %v913, %v909
        %v915 = vmul.f32 %v914, %v909
        %v916 = vadd.f32 %v909, %v915
        %v917 = vmul.f32 %v916, 0.7978846
        %v918 = vtanh.pop %v917
        %v919 = vadd.f32 %v918, 1.0
        %v920 = vmul.f32 %v912, %v919
        %v921 = vld [vmem:[%s626] sm:$0xf]
        %v922 = vpack.c.bf16 %v920, %v920
        %v924 = vsel %vm554, %v921, 0
        %v927 = vsel %vm558, %v922, 0
        %929 = vmatpush.bf16.msra.mxu0 0
        %930 = vmatpush.bf16.msra.mxu0 0
        %931 = vmatpush.bf16.msra.mxu0 0
        %932 = vmatpush.bf16.msra.mxu0 0
        %933 = vmatpush.bf16.msra.mxu0 0
        %934 = vmatpush.bf16.msra.mxu0 0
        %935 = vmatpush.bf16.msra.mxu0 0
        %936 = vmatpush.bf16.msra.mxu0 %v927
        %937 = vmatmul.bf16.gmra.mxu0 %v924
        %v938 = vpop.f32.mrf.mxu0
        %v939 = vadd.f32 0.0, %v938
        %v940 = vpop.f32.mrf.mxu0
        %941 = vdwg.mxu0
        %943 = vrot.lane.b32.xlu0 %v939, 8
        %v944 = vpop.permute.xlu0 %943
        %v946 = vadd.f32 %v444, %v944
        %v947 = vld [vmem:[%s653] sm:$0xff]
        %949 = vset.pattern.permute.xlu0 0
        %950 = vperm.xlu0 %949, %v947
        %v951 = vpop.permute.xlu0 %950
        %v953 = vadd.f32 %v946, %v951
        %954 = vst.msk [vmem:[%s879] sm:$0xff] %vm661, %v953
        %v955 = vld [vmem:[%s663] sm:$0x3]
        %v956 = vld [vmem:[%s665] sm:$0xf]
        %958 = vset.pattern.permute.xlu0 0
        %959 = vperm.xlu0 %958, %v956
        %v960 = vpop.permute.xlu0 %959
        %962 = vrot.lane.b32.xlu0 %v890, 112
        %v963 = vpop.permute.xlu0 %962
        %v965 = vsel %vm522, %v955, 0
        %v968 = vsel %vm526, %v963, 0
        %970 = vmatpush.bf16.msra.mxu0 0
        %971 = vmatpush.bf16.msra.mxu0 0
        %972 = vmatpush.bf16.msra.mxu0 0
        %973 = vmatpush.bf16.msra.mxu0 0
        %974 = vmatpush.bf16.msra.mxu0 0
        %975 = vmatpush.bf16.msra.mxu0 0
        %976 = vmatpush.bf16.msra.mxu0 0
        %977 = vmatpush.bf16.msra.mxu0 %v968
        %978 = vmatmul.bf16.gmra.mxu0 %v965
        %v979 = vpop.f32.mrf.mxu0
        %v980 = vadd.f32 %v960, %v979
        %v981 = vpop.f32.mrf.mxu0
        %982 = vdwg.mxu0
        %v983 = vmul.f32 %v980, 0.5
        %v984 = vmul.f32 %v980, 0.044715
        %v985 = vmul.f32 %v984, %v980
        %v986 = vmul.f32 %v985, %v980
        %v987 = vadd.f32 %v980, %v986
        %v988 = vmul.f32 %v987, 0.7978846
        %v989 = vtanh.pop %v988
        %v990 = vadd.f32 %v989, 1.0
        %v991 = vmul.f32 %v983, %v990
        %v992 = vld [vmem:[%s702] sm:$0xf]
        %v993 = vpack.c.bf16 %v991, %v991
        %v995 = vsel %vm554, %v992, 0
        %v998 = vsel %vm558, %v993, 0
        %1000 = vmatpush.bf16.msra.mxu0 0
        %1001 = vmatpush.bf16.msra.mxu0 0
        %1002 = vmatpush.bf16.msra.mxu0 0
        %1003 = vmatpush.bf16.msra.mxu0 0
        %1004 = vmatpush.bf16.msra.mxu0 0
        %1005 = vmatpush.bf16.msra.mxu0 0
        %1006 = vmatpush.bf16.msra.mxu0 0
        %1007 = vmatpush.bf16.msra.mxu0 %v998
        %1008 = vmatmul.bf16.gmra.mxu0 %v995
        %v1009 = vpop.f32.mrf.mxu0
        %v1010 = vadd.f32 0.0, %v1009
        %v1011 = vpop.f32.mrf.mxu0
        %1012 = vdwg.mxu0
        %1014 = vrot.lane.b32.xlu0 %v1010, 16
        %v1015 = vpop.permute.xlu0 %1014
        %v1017 = vadd.f32 %v444, %v1015
        %v1018 = vld [vmem:[%s729] sm:$0xff]
        %1020 = vset.pattern.permute.xlu0 0
        %1021 = vperm.xlu0 %1020, %v1018
        %v1022 = vpop.permute.xlu0 %1021
        %v1024 = vadd.f32 %v1017, %v1022
        %1025 = vst.msk [vmem:[%s879] sm:$0xff] %vm737, %v1024
        %v1026 = vld [vmem:[%s739] sm:$0x3]
        %v1027 = vld [vmem:[%s741] sm:$0xf]
        %1029 = vset.pattern.permute.xlu0 0
        %1030 = vperm.xlu0 %1029, %v1027
        %v1031 = vpop.permute.xlu0 %1030
        %1033 = vrot.lane.b32.xlu0 %v890, 104
        %v1034 = vpop.permute.xlu0 %1033
        %v1036 = vsel %vm522, %v1026, 0
        %v1039 = vsel %vm526, %v1034, 0
        %1041 = vmatpush.bf16.msra.mxu0 0
        %1042 = vmatpush.bf16.msra.mxu0 0
        %1043 = vmatpush.bf16.msra.mxu0 0
        %1044 = vmatpush.bf16.msra.mxu0 0
        %1045 = vmatpush.bf16.msra.mxu0 0
        %1046 = vmatpush.bf16.msra.mxu0 0
        %1047 = vmatpush.bf16.msra.mxu0 0
        %1048 = vmatpush.bf16.msra.mxu0 %v1039
        %1049 = vmatmul.bf16.gmra.mxu0 %v1036
        %v1050 = vpop.f32.mrf.mxu0
        %v1051 = vadd.f32 %v1031, %v1050
        %v1052 = vpop.f32.mrf.mxu0
        %1053 = vdwg.mxu0
        %v1054 = vmul.f32 %v1051, 0.5
        %v1055 = vmul.f32 %v1051, 0.044715
        %v1056 = vmul.f32 %v1055, %v1051
        %v1057 = vmul.f32 %v1056, %v1051
        %v1058 = vadd.f32 %v1051, %v1057
        %v1059 = vmul.f32 %v1058, 0.7978846
        %v1060 = vtanh.pop %v1059
        %v1061 = vadd.f32 %v1060, 1.0
        %v1062 = vmul.f32 %v1054, %v1061
        %v1063 = vld [vmem:[%s778] sm:$0xf]
        %v1064 = vpack.c.bf16 %v1062, %v1062
        %v1066 = vsel %vm554, %v1063, 0
        %v1069 = vsel %vm558, %v1064, 0
        %1071 = vmatpush.bf16.msra.mxu0 0
        %1072 = vmatpush.bf16.msra.mxu0 0
        %1073 = vmatpush.bf16.msra.mxu0 0
        %1074 = vmatpush.bf16.msra.mxu0 0
        %1075 = vmatpush.bf16.msra.mxu0 0
        %1076 = vmatpush.bf16.msra.mxu0 0
        %1077 = vmatpush.bf16.msra.mxu0 0
        %1078 = vmatpush.bf16.msra.mxu0 %v1069
        %1079 = vmatmul.bf16.gmra.mxu0 %v1066
        %v1080 = vpop.f32.mrf.mxu0
        %v1081 = vadd.f32 0.0, %v1080
        %v1082 = vpop.f32.mrf.mxu0
        %1083 = vdwg.mxu0
        %1085 = vrot.lane.b32.xlu0 %v1081, 24
        %v1086 = vpop.permute.xlu0 %1085
        %v1088 = vadd.f32 %v444, %v1086
        %v1089 = vld [vmem:[%s805] sm:$0xff]
        %1091 = vset.pattern.permute.xlu0 0
        %1092 = vperm.xlu0 %1091, %v1089
        %v1093 = vpop.permute.xlu0 %1092
        %v1095 = vadd.f32 %v1088, %v1093
        %1096 = vst.msk [vmem:[%s879] sm:$0xff] %vm813, %v1095
        %v1097 = vld [vmem:[#allocation2] sm:$0xff]
        %v1098 = vld [vmem:[#allocation2 + $0x8] sm:$0xff]
        %v1099 = vld [vmem:[%s7] sm:$0x1]
        %v1100 = vld [vmem:[%s8] sm:$0x1]
        %v1101 = vsel %vm447, %v1097, 0.0
        %1102 = vadd.xlane.f32.xlu0 %v1101
        %v1103 = vpop.xlane.xlu0 %1102
        %v1104 = vsel %vm447, %v1098, 0.0
        %1105 = vadd.xlane.f32.xlu0 %v1104
        %v1106 = vpop.xlane.xlu0 %1105
        %v1107 = vmul.f32 %v1103, %v460
        %v1108 = vmul.f32 %v1106, %v460
        %v1109 = vmul.f32 %v1097, %v1097
        %v1110 = vmul.f32 %v1098, %v1098
        %v1111 = vsel %vm447, %v1109, 0.0
        %1112 = vadd.xlane.f32.xlu0 %v1111
        %v1113 = vpop.xlane.xlu0 %1112
        %v1114 = vsel %vm447, %v1110, 0.0
        %1115 = vadd.xlane.f32.xlu0 %v1114
        %v1116 = vpop.xlane.xlu0 %1115
        %v1117 = vmul.f32 %v1113, %v460
        %v1118 = vmul.f32 %v1116, %v460
        %v1119 = vmul.f32 %v1107, %v1107
        %v1120 = vmul.f32 %v1108, %v1108
        %v1121 = vsub.f32 %v1117, %v1119
        %v1122 = vsub.f32 %v1118, %v1120
        %v1123 = vsub.f32 %v1097, %v1107
        %v1124 = vsub.f32 %v1098, %v1108
        %v1125 = vadd.f32 %v1121, 1e-06
        %v1126 = vadd.f32 %v1122, 1e-06
        %v1127 = vrsqrt.pop %v1125
        %v1128 = vmul.f32 %v1127, %v1125
        %v1129 = vmul.f32 %v1128, %v1127
        %v1130 = vmul.f32 0.5, %v1129
        %v1131 = vsub.f32 1.5, %v1130
        %v1132 = vmul.f32 %v1127, %v1131
        %vm1133 = vweird.f32 %v1125
        %vm1134 = vweird.f32 %v1127
        %vm1135 = vmor %vm1133, %vm1134
        %v1136 = vsel %vm1135, %v1127, %v1132
        %v1137 = vrsqrt.pop %v1126
        %v1138 = vmul.f32 %v1137, %v1126
        %v1139 = vmul.f32 %v1138, %v1137
        %v1140 = vmul.f32 0.5, %v1139
        %v1141 = vsub.f32 1.5, %v1140
        %v1142 = vmul.f32 %v1137, %v1141
        %vm1143 = vweird.f32 %v1126
        %vm1144 = vweird.f32 %v1137
        %vm1145 = vmor %vm1143, %vm1144
        %v1146 = vsel %vm1145, %v1137, %v1142
        %v1147 = vmul.f32 %v1123, %v1136
        %v1148 = vmul.f32 %v1124, %v1146
        %v1150 = vperm.slane %v1099, 0
        %v1152 = vmul.f32 %v1147, %v1150
        %v1153 = vmul.f32 %v1148, %v1150
        %v1155 = vperm.slane %v1100, 0
        %v1157 = vadd.f32 %v1152, %v1155
        %v1158 = vadd.f32 %v1153, %v1155
        %v1159 = vpack.c.bf16 %v1158, %v1157
        %v1160 = vld [vmem:[%s9] sm:$0xf]
        %v1161 = vld [vmem:[%s9 + $0x4] sm:$0xf]
        %v1162 = vld [vmem:[%s9 + $0x8] sm:$0xf]
        %v1163 = vld [vmem:[%s9 + $0xc] sm:$0xf]
        %v1164 = vld [vmem:[%s10] sm:$0x1]
        %v1166 = vperm.slane %v1164, 0
        %v1172 = vunpack.c.l.b16 %v1160
        %v1173 = vunpack.c.l.b16 %v1161
        %v1174 = vunpack.c.l.b16 %v1162
        %v1175 = vunpack.c.l.b16 %v1163
        %v1176 = vpack.c.b16 %v1173, %v1172
        %v1177 = vpack.c.b16 %v1175, %v1174
        %v1181 = vsel %vm447, %v1159, 0
        %1183 = vmatpush.bf16.msra.mxu0 0
        %1184 = vmatpush.bf16.msra.mxu0 0
        %1185 = vmatpush.bf16.msra.mxu0 0
        %1186 = vmatpush.bf16.msra.mxu0 0
        %1187 = vmatpush.bf16.msra.mxu0 0
        %1188 = vmatpush.bf16.msra.mxu0 0
        %1189 = vmatpush.bf16.msra.mxu0 %v1177
        %1190 = vmatpush.bf16.msra.mxu0 %v1176
        %1191 = vmatmul.bf16.gmra.mxu0 %v1181
        %v1192 = vpop.f32.mrf.mxu0
        %v1193 = vadd.f32 %v1166, %v1192
        %v1194 = vpop.f32.mrf.mxu0
        %v1195 = vadd.f32 %v1166, %v1194
        %1196 = vdwg.mxu0
        %v1197 = vmul.f32 %v1193, 0.5
        %v1198 = vmul.f32 %v1195, 0.5
        %v1199 = vmul.f32 %v1193, 0.044715
        %v1200 = vmul.f32 %v1195, 0.044715
        %v1201 = vmul.f32 %v1199, %v1193
        %v1202 = vmul.f32 %v1200, %v1195
        %v1203 = vmul.f32 %v1201, %v1193
        %v1204 = vmul.f32 %v1202, %v1195
        %v1205 = vadd.f32 %v1193, %v1203
        %v1206 = vadd.f32 %v1195, %v1204
        %v1207 = vmul.f32 %v1205, 0.7978846
        %v1208 = vmul.f32 %v1206, 0.7978846
        %v1209 = vtanh.pop %v1207
        %v1210 = vtanh.pop %v1208
        %v1211 = vadd.f32 %v1209, 1.0
        %v1212 = vadd.f32 %v1210, 1.0
        %v1213 = vmul.f32 %v1197, %v1211
        %v1214 = vmul.f32 %v1198, %v1212
        %v1215 = vpack.c.bf16 %v1214, %v1213
        %v1216 = vld [vmem:[%s11] sm:$0xf]
        %v1217 = vld [vmem:[%s11 + $0x4] sm:$0xf]
        %v1218 = vld [vmem:[%s11 + $0x8] sm:$0xf]
        %v1219 = vld [vmem:[%s11 + $0xc] sm:$0xf]
        %v1220 = vld [vmem:[%s11 + $0x10] sm:$0xf]
        %v1221 = vld [vmem:[%s11 + $0x14] sm:$0xf]
        %v1222 = vld [vmem:[%s11 + $0x18] sm:$0xf]
        %v1223 = vld [vmem:[%s11 + $0x1c] sm:$0xf]
        %v1224 = vld [vmem:[%s11 + $0x20] sm:$0xf]
        %v1225 = vld [vmem:[%s11 + $0x24] sm:$0xf]
        %v1226 = vld [vmem:[%s11 + $0x28] sm:$0xf]
        %v1227 = vld [vmem:[%s11 + $0x2c] sm:$0xf]
        %v1228 = vld [vmem:[%s11 + $0x30] sm:$0xf]
        %v1229 = vld [vmem:[%s11 + $0x34] sm:$0xf]
        %v1230 = vld [vmem:[%s11 + $0x38] sm:$0xf]
        %v1231 = vld [vmem:[%s11 + $0x3c] sm:$0xf]
        %v1232 = vld [vmem:[%s12] sm:$0x1]
        %v1234 = vperm.slane %v1232, 0
        %v1252 = vunpack.c.l.b16 %v1216
        %v1253 = vunpack.c.l.b16 %v1217
        %v1254 = vunpack.c.l.b16 %v1218
        %v1255 = vunpack.c.l.b16 %v1219
        %v1256 = vunpack.c.l.b16 %v1220
        %v1257 = vunpack.c.l.b16 %v1221
        %v1258 = vunpack.c.l.b16 %v1222
        %v1259 = vunpack.c.l.b16 %v1223
        %v1260 = vunpack.c.l.b16 %v1224
        %v1261 = vunpack.c.l.b16 %v1225
        %v1262 = vunpack.c.l.b16 %v1226
        %v1263 = vunpack.c.l.b16 %v1227
        %v1264 = vunpack.c.l.b16 %v1228
        %v1265 = vunpack.c.l.b16 %v1229
        %v1266 = vunpack.c.l.b16 %v1230
        %v1267 = vunpack.c.l.b16 %v1231
        %v1268 = vpack.c.b16 %v1253, %v1252
        %v1269 = vpack.c.b16 %v1255, %v1254
        %v1270 = vpack.c.b16 %v1257, %v1256
        %v1271 = vpack.c.b16 %v1259, %v1258
        %v1272 = vpack.c.b16 %v1261, %v1260
        %v1273 = vpack.c.b16 %v1263, %v1262
        %v1274 = vpack.c.b16 %v1265, %v1264
        %v1275 = vpack.c.b16 %v1267, %v1266
        %1284 = vmatpush.bf16.msra.mxu0 %v1275
        %1285 = vmatpush.bf16.msra.mxu0 %v1274
        %1286 = vmatpush.bf16.msra.mxu0 %v1273
        %1287 = vmatpush.bf16.msra.mxu0 %v1272
        %1288 = vmatpush.bf16.msra.mxu0 %v1271
        %1289 = vmatpush.bf16.msra.mxu0 %v1270
        %1290 = vmatpush.bf16.msra.mxu0 %v1269
        %1291 = vmatpush.bf16.msra.mxu0 %v1268
        %1292 = vmatmul.bf16.gmra.mxu0 %v1215
        %v1293 = vpop.f32.mrf.mxu0
        %v1294 = vadd.f32 %v1234, %v1293
        %v1295 = vpop.f32.mrf.mxu0
        %v1296 = vadd.f32 %v1234, %v1295
        %1297 = vdwg.mxu0
        %v1298 = vadd.f32 %v1097, %v1294
        %v1299 = vadd.f32 %v1098, %v1296
        %1300 = vst.msk [vmem:[%s434] sm:$0xff] %vm447, %v1298
        %1301 = vst.msk [vmem:[%s434 + $0x8] sm:$0xff] %vm447, %v1299
        %s1302 = sand.u32 %s313, 1
        %s1303 = scalar_lea.sflag [#allocation4], %s1302
        %s1304 = sand.u32 %s313, 1
        %s1305 = smul.addr %s1304, 16
        %s1306 = scalar_lea.vmem [#allocation3], %s1305
        // Predicated region
        $region73: #{tpu_custom_call.1} parent=71 // pred_check
          %p1307 = pneg %p323
        $region74: #{tpu_custom_call.1} parent=71 // pred_check_branch
          %1309 = sbr.rel (%p1307) target = $region76
        $region75: #{tpu_custom_call.1} parent=71 // pred_region
          %s1310 = smul.u32 2, %s27
          %1312 = vsyncadd %s1303, 0
          %s1313 = smul.addr %s1310, 8
          %s1314 = scalar_lea.hbm %s13, %s1313
          %s1315 = sshll.u32 %s1306, 4
          %s1316 = int_to_ptr.vmem [resolvable:$true] %s1315
          %s1317 = sshll.u32 %s1314, 4
          %s1318 = int_to_ptr.hbm [resolvable:$true] %s1317
          %1323 = dma.vmem_to_hbm [thread:$0]  %s1316, 256, %s1318, %s1303, 128, 128, 8
        $region76: #{tpu_custom_call.1} parent=71 // pred_fallthru
          _
      $region72: #{tpu_custom_call.1} parent=5 // pred_fallthru
        _
      %p1324 = scmp.le.s32.totalorder 2, %s22
      // Predicated region
      $region77: #{tpu_custom_call.1} parent=5 // pred_check
        %p1325 = pneg %p1324
      $region78: #{tpu_custom_call.1} parent=5 // pred_check_branch
        %1327 = sbr.rel (%p1325) target = $region80
      $region79: #{tpu_custom_call.1} parent=5 // pred_region
        %s1328 = ssub.s32 %s22, 2
        // Predicated region
        $region81: #{tpu_custom_call.1} parent=79 // pred_check
          %p1329 = pneg %p329
        $region82: #{tpu_custom_call.1} parent=79 // pred_check_branch
          %1331 = sbr.rel (%p1329) target = $region84
        $region83: #{tpu_custom_call.1} parent=79 // pred_region
          %s1332 = sand.u32 %s314, 1
          %s1333 = scalar_lea.sflag [#allocation4], %s1332
          %s1334 = sand.u32 %s314, 1
          %s1335 = smul.addr %s1334, 16
          %s1336 = scalar_lea.vmem [#allocation3], %s1335
          %1338 = dma.done %s1333, 256
        $region84: #{tpu_custom_call.1} parent=79 // pred_fallthru
          _
      $region80: #{tpu_custom_call.1} parent=5 // pred_fallthru
        _
    $region6: #{tpu_custom_call.1} parent=1 // loop_footer
      %s26 = sadd.s32 1, %s22
    $region7: #{tpu_custom_call.1} parent=1 // loop_footer_branch
      %21 = sbr.rel target = $region3
    $region8: #{tpu_custom_call.1} parent=1 // loop_exit
      _
    %1339 = vsyncpa [#allocation4], 1
    %s1340 = scalar_lea.sflag [#allocation4], 1
    %1341 = vsyncpa %s1340, 1

</llo_original>
